<compile_context>
chip_gen: v7x
topology: tpu7x:2x2x1
jax: 0.10.0
libtpu: 0.0.40
codegen_flags: <defaults>
</compile_context>

<pallas_src>
import jax
import jax.numpy as jnp
from jax.experimental import pallas as pl
from jax.experimental.pallas import tpu as pltpu

LANE = 128
SUBLANE_BF16 = 16        # minimum bf16 sublane tile (16, 128)


def _round_up(x, m):
    return (x + m - 1) // m * m


# --------------------------------------------------------------------------- #
# Kernel
# --------------------------------------------------------------------------- #
def autoencoder_kernel(x_ref,
                       ew1, ew2, ew3, dw1, dw2, dw3,
                       bias_ref,
                       out_ref):
    """Fused 6-layer (encoder + decoder) MLP forward on one (TILE_B, *) batch tile.

    Matmuls run in bf16 on the MXU with f32 accumulation; bias-add + ReLU run in
    f32 on the VPU (v5e-safe); intermediates are cast back to bf16 between layers.
    All weights and the bias table are VMEM-resident across the whole grid.
    """

    def layer(h_bf16, w_ref, layer_idx, relu):
        out_dim = w_ref.shape[1]
        acc = jnp.dot(h_bf16, w_ref[...], preferred_element_type=jnp.float32)
        acc = acc + bias_ref[layer_idx:layer_idx + 1, :out_dim]   # (1,N) -> (tb,N)
        if relu:
            acc = jnp.maximum(acc, 0.0)
        return acc

    h = x_ref[...]                                       # bf16 (TILE_B, IN_P)
    # ---- encoder: input -> hidden -> hidden -> latent ----
    h = layer(h, ew1, 0, True).astype(jnp.bfloat16)
    h = layer(h, ew2, 1, True).astype(jnp.bfloat16)
    z = layer(h, ew3, 2, False).astype(jnp.bfloat16)
    # ---- decoder: latent -> hidden -> hidden -> input ----
    h = layer(z, dw1, 3, True).astype(jnp.bfloat16)
    h = layer(h, dw2, 4, True).astype(jnp.bfloat16)
    x_hat = layer(h, dw3, 5, False)                      # f32 epilogue
    out_ref[...] = x_hat.astype(out_ref.dtype)


# --------------------------------------------------------------------------- #
# One-time parameter preparation (hoisted out of the per-call path)
# --------------------------------------------------------------------------- #
def prepare_params(params):
    """Zero-pad every feature dim to a multiple of 128 (lane-dense matmuls and
    stores), cast weights to bf16 for the MXU, and consolidate the 6 bias
    vectors into a single (6, bmax) f32 table. Call once, reuse per forward."""
    n_layers = len(params)
    in_p = [_round_up(w.shape[0], LANE) for w, _ in params]
    out_p = [_round_up(w.shape[1], LANE) for w, _ in params]
    bmax = max(out_p)

    ws = []
    biases = jnp.zeros((n_layers, bmax), jnp.float32)
    for i, (w, b) in enumerate(params):
        wp = jnp.zeros((in_p[i], out_p[i]), jnp.float32)
        wp = wp.at[:w.shape[0], :w.shape[1]].set(w)
        ws.append(wp.astype(jnp.bfloat16))               # bf16 MXU weights
        biases = biases.at[i, :b.shape[0]].set(b)        # zero-padded bias cols

    return {
        "weights": tuple(ws),
        "biases": biases,
        "input_dim": params[0][0].shape[0],
        "output_dim": params[-1][0].shape[1],
        "in_dim_p": in_p[0],
        "out_dim_p": out_p[-1],
    }


# --------------------------------------------------------------------------- #
# Forward wrapper
# --------------------------------------------------------------------------- #
def autoencoder_forward(x, prep, *, tile_b=None, out_dtype=jnp.float32):
    """x: (B, input_dim) float32/bf16. prep: output of prepare_params()."""
    B, input_dim = x.shape
    assert input_dim == prep["input_dim"], "input_dim mismatch with prepared params"
    ws, biases = prep["weights"], prep["biases"]
    in_dim_p, out_dim_p = prep["in_dim_p"], prep["out_dim_p"]
    out_itemsize = jnp.dtype(out_dtype).itemsize

    # ---- batch tile: bf16-sublane-dense (multiple of 16), MXU-friendly --------
    # 256-row tiles better fill the 2x256x256 MXU on v6e/v7x when B is large;
    # 128 already maps exactly onto v5e's 4x128x128 MXU.
    # TODO(synk): pick 128 vs 256 from the actual chip generation at runtime.
    if tile_b is None:
        tile_b = 256 if B >= 512 else 128
    tb = max(SUBLANE_BF16,
             min(_round_up(tile_b, SUBLANE_BF16), _round_up(B, SUBLANE_BF16)))
    Bp = _round_up(B, tb)
    grid = (Bp // tb,)

    # ---- pad x straight to bf16 (single pass, no f32 round-trip) --------------
    if (Bp, in_dim_p) == (B, input_dim) and x.dtype == jnp.bfloat16:
        xp = x
    else:
        xp = jnp.zeros((Bp, in_dim_p), jnp.bfloat16)
        xp = xp.at[:B, :input_dim].set(x.astype(jnp.bfloat16))

    # ---- VMEM budgeting / residency guard --------------------------------------
    w_bytes = sum(int(w.size) * 2 for w in ws)
    b_bytes = int(biases.size) * 4
    try:
        vmem_cap = int(pltpu.get_tpu_info().vmem_capacity_bytes)
    except Exception:
        vmem_cap = 64 << 20                              # v7x per-TC capacity (worst case)
    if w_bytes > vmem_cap // 2:
        # TODO(synk): fall back to a K/N-tiled reduction-grid kernel for weights
        # too large to stay VMEM-resident (first breaks on v7x's 64 MiB VMEM).
        raise NotImplementedError(
            f"weights ({w_bytes} B) exceed half of VMEM ({vmem_cap} B); "
            "VMEM-resident design not applicable")

    # ---- cost hint for the XLA scheduler ----------------------------------------
    flops = 2 * Bp * sum(int(w.shape[0]) * int(w.shape[1]) for w in ws)
    bytes_accessed = (int(xp.size) * 2 + w_bytes + b_bytes
                      + Bp * out_dim_p * out_itemsize)

    x_spec = pl.BlockSpec((tb, in_dim_p), lambda i: (i, 0))
    out_spec = pl.BlockSpec((tb, out_dim_p), lambda i: (i, 0))

    def _run(single_buffer_consts):
        # Grid-invariant operands: constant index_map -> fetched once, VMEM-resident.
        spec_kwargs = {}
        if single_buffer_consts and hasattr(pl, "Buffered"):
            spec_kwargs = dict(pipeline_mode=pl.Buffered(1))
        w_specs = [pl.BlockSpec(w.shape, lambda i: (0, 0), **spec_kwargs) for w in ws]
        b_spec = pl.BlockSpec(biases.shape, lambda i: (0, 0), **spec_kwargs)
        const_bufs = 1 if spec_kwargs else 2

        vmem_limit = (2 * (tb * in_dim_p * 2 + tb * out_dim_p * out_itemsize)  # dbl-buffered tiles
                      + const_bufs * (w_bytes + b_bytes)                       # resident consts
                      + (8 << 20))                                             # headroom
        vmem_limit = int(min(max(vmem_limit, 16 << 20), vmem_cap))

        return pl.pallas_call(
            autoencoder_kernel,
            out_shape=jax.ShapeDtypeStruct((Bp, out_dim_p), out_dtype),
            grid=grid,
            in_specs=[x_spec, *w_specs, b_spec],
            out_specs=out_spec,
            compiler_params=pltpu.CompilerParams(
                dimension_semantics=("parallel",),
                vmem_limit_bytes=vmem_limit),
            cost_estimate=pl.CostEstimate(flops=flops,
                                          bytes_accessed=bytes_accessed,
                                          transcendentals=0),
        )(xp, *ws, biases)

    try:
        out_padded = _run(True)          # single-buffered resident weights
    except Exception:
        out_padded = _run(False)         # conservative fallback (default buffering)

    # slice zero-padded rows / lanes back off (padded rows carry bias garbage)
    return out_padded[:B, :prep["output_dim"]]


# --------------------------------------------------------------------------- #
# Parameter init + pure-JAX reference
# --------------------------------------------------------------------------- #
def init_params(key, input_dim, latent_dim, hidden_dim):
    """Deterministic Kaiming-uniform-ish init for the 6 Linear layers."""
    dims = [
        # encoder: input_dim -> hidden -> hidden -> latent
        (input_dim, hidden_dim), (hidden_dim, hidden_dim), (hidden_dim, latent_dim),
        # decoder: latent -> hidden -> hidden -> input_dim
        (latent_dim, hidden_dim), (hidden_dim, hidden_dim), (hidden_dim, input_dim),
    ]
    params = []
    keys = jax.random.split(key, len(dims) * 2)
    for i, (d_in, d_out) in enumerate(dims):
        bound = 1.0 / jnp.sqrt(jnp.float32(d_in))
        w = jax.random.uniform(keys[2 * i], (d_in, d_out), jnp.float32, -bound, bound)
        b = jax.random.uniform(keys[2 * i + 1], (d_out,), jnp.float32, -bound, bound)
        params.append((w, b))
    return params


def reference_forward(x, params):
    """Pure-JAX reference mirroring the kernel's dtype strategy
    (bf16 matmul inputs, f32 accumulation, f32 bias/ReLU epilogue)."""
    def mlp(h, layers):
        for i, (w, b) in enumerate(layers):
            h = jnp.dot(h.astype(jnp.bfloat16), w.astype(jnp.bfloat16),
                        preferred_element_type=jnp.float32) + b
            if i < len(layers) - 1:
                h = jnp.maximum(h, 0.0)
        return h
    z = mlp(x, params[:3])
    return mlp(z, params[3:])


if __name__ == "__main__":
    B, INPUT_DIM, LATENT_DIM, HIDDEN_DIM = 2, 64, 16, 32

    key = jax.random.PRNGKey(0)
    k_x, k_p = jax.random.split(key)
    x = jax.random.normal(k_x, (B, INPUT_DIM), jnp.float32)
    params = init_params(k_p, INPUT_DIM, LATENT_DIM, HIDDEN_DIM)

    prep = prepare_params(params)               # one-time padding / bf16 cast
    out = autoencoder_forward(x, prep)          # f32 output path for the check
    out = jax.block_until_ready(out)

    ref = reference_forward(x, params)
    assert out.shape == (B, INPUT_DIM)
    assert jnp.allclose(out, ref, atol=1e-2, rtol=1e-2), "mismatch vs reference"

    print("KERNEL_OK")
</pallas_src>

<mosaic_0001>
module attributes {stable_mosaic.version = 11 : i64} {
  func.func @autoencoder_kernel(%arg0: i32, %arg1: memref<16x128xbf16, #tpu.memory_space<vmem>>, %arg2: memref<128x128xbf16, #tpu.memory_space<vmem>>, %arg3: memref<128x128xbf16, #tpu.memory_space<vmem>>, %arg4: memref<128x128xbf16, #tpu.memory_space<vmem>>, %arg5: memref<128x128xbf16, #tpu.memory_space<vmem>>, %arg6: memref<128x128xbf16, #tpu.memory_space<vmem>>, %arg7: memref<128x128xbf16, #tpu.memory_space<vmem>>, %arg8: memref<6x128xf32, #tpu.memory_space<vmem>>, %arg9: memref<16x128xf32, #tpu.memory_space<vmem>>) attributes {dimension_semantics = [#tpu.dimension_semantics<parallel>], iteration_bounds = array<i64: 1>, scalar_prefetch = 0 : i64, scratch_operands = 0 : i64, tpu.core_type = #tpu.core_type<tc>, window_params = [{transform_indices = @transform_0, window_bounds = array<i64: 16, 128>}, {pipeline_mode = #tpu.pipeline_mode<synchronous>, transform_indices = @transform_1, window_bounds = array<i64: 128, 128>}, {pipeline_mode = #tpu.pipeline_mode<synchronous>, transform_indices = @transform_2, window_bounds = array<i64: 128, 128>}, {pipeline_mode = #tpu.pipeline_mode<synchronous>, transform_indices = @transform_3, window_bounds = array<i64: 128, 128>}, {pipeline_mode = #tpu.pipeline_mode<synchronous>, transform_indices = @transform_4, window_bounds = array<i64: 128, 128>}, {pipeline_mode = #tpu.pipeline_mode<synchronous>, transform_indices = @transform_5, window_bounds = array<i64: 128, 128>}, {pipeline_mode = #tpu.pipeline_mode<synchronous>, transform_indices = @transform_6, window_bounds = array<i64: 128, 128>}, {pipeline_mode = #tpu.pipeline_mode<synchronous>, transform_indices = @transform_7, window_bounds = array<i64: 6, 128>}, {transform_indices = @transform_8, window_bounds = array<i64: 16, 128>}]} {
    %c0 = arith.constant 0 : index
    %c0_0 = arith.constant 0 : index
    %0 = vector.load %arg1[%c0, %c0_0] : memref<16x128xbf16, #tpu.memory_space<vmem>>, vector<16x128xbf16>
    %c0_1 = arith.constant 0 : index
    %c0_2 = arith.constant 0 : index
    %1 = vector.load %arg2[%c0_1, %c0_2] : memref<128x128xbf16, #tpu.memory_space<vmem>>, vector<128x128xbf16>
    %cst = arith.constant dense<0.000000e+00> : vector<16x128xf32>
    %2 = tpu.matmul %0, %1, %cst {dimension_numbers = #tpu.dot_dimension_numbers<[1], [0], [0], [1], [0, 0, 1, 1], [], []>} : vector<16x128xbf16>, vector<128x128xbf16>, vector<16x128xf32> -> vector<16x128xf32>
    %c0_3 = arith.constant 0 : index
    %c0_4 = arith.constant 0 : index
    %3 = vector.load %arg8[%c0_3, %c0_4] : memref<6x128xf32, #tpu.memory_space<vmem>>, vector<1x128xf32>
    %4 = vector.broadcast %3 : vector<1x128xf32> to vector<16x128xf32>
    %5 = arith.addf %2, %4 : vector<16x128xf32>
    %cst_5 = arith.constant 0.000000e+00 : f32
    %6 = vector.broadcast %cst_5 : f32 to vector<16x128xf32>
    %7 = arith.maximumf %5, %6 : vector<16x128xf32>
    %8 = arith.truncf %7 : vector<16x128xf32> to vector<16x128xbf16>
    %c0_6 = arith.constant 0 : index
    %c0_7 = arith.constant 0 : index
    %9 = vector.load %arg3[%c0_6, %c0_7] : memref<128x128xbf16, #tpu.memory_space<vmem>>, vector<128x128xbf16>
    %cst_8 = arith.constant dense<0.000000e+00> : vector<16x128xf32>
    %10 = tpu.matmul %8, %9, %cst_8 {dimension_numbers = #tpu.dot_dimension_numbers<[1], [0], [0], [1], [0, 0, 1, 1], [], []>} : vector<16x128xbf16>, vector<128x128xbf16>, vector<16x128xf32> -> vector<16x128xf32>
    %c1 = arith.constant 1 : index
    %c0_9 = arith.constant 0 : index
    %11 = vector.load %arg8[%c1, %c0_9] : memref<6x128xf32, #tpu.memory_space<vmem>>, vector<1x128xf32>
    %12 = vector.broadcast %11 : vector<1x128xf32> to vector<16x128xf32>
    %13 = arith.addf %10, %12 : vector<16x128xf32>
    %cst_10 = arith.constant 0.000000e+00 : f32
    %14 = vector.broadcast %cst_10 : f32 to vector<16x128xf32>
    %15 = arith.maximumf %13, %14 : vector<16x128xf32>
    %16 = arith.truncf %15 : vector<16x128xf32> to vector<16x128xbf16>
    %c0_11 = arith.constant 0 : index
    %c0_12 = arith.constant 0 : index
    %17 = vector.load %arg4[%c0_11, %c0_12] : memref<128x128xbf16, #tpu.memory_space<vmem>>, vector<128x128xbf16>
    %cst_13 = arith.constant dense<0.000000e+00> : vector<16x128xf32>
    %18 = tpu.matmul %16, %17, %cst_13 {dimension_numbers = #tpu.dot_dimension_numbers<[1], [0], [0], [1], [0, 0, 1, 1], [], []>} : vector<16x128xbf16>, vector<128x128xbf16>, vector<16x128xf32> -> vector<16x128xf32>
    %c2 = arith.constant 2 : index
    %c0_14 = arith.constant 0 : index
    %19 = vector.load %arg8[%c2, %c0_14] : memref<6x128xf32, #tpu.memory_space<vmem>>, vector<1x128xf32>
    %20 = vector.broadcast %19 : vector<1x128xf32> to vector<16x128xf32>
    %21 = arith.addf %18, %20 : vector<16x128xf32>
    %22 = arith.truncf %21 : vector<16x128xf32> to vector<16x128xbf16>
    %c0_15 = arith.constant 0 : index
    %c0_16 = arith.constant 0 : index
    %23 = vector.load %arg5[%c0_15, %c0_16] : memref<128x128xbf16, #tpu.memory_space<vmem>>, vector<128x128xbf16>
    %cst_17 = arith.constant dense<0.000000e+00> : vector<16x128xf32>
    %24 = tpu.matmul %22, %23, %cst_17 {dimension_numbers = #tpu.dot_dimension_numbers<[1], [0], [0], [1], [0, 0, 1, 1], [], []>} : vector<16x128xbf16>, vector<128x128xbf16>, vector<16x128xf32> -> vector<16x128xf32>
    %c3 = arith.constant 3 : index
    %c0_18 = arith.constant 0 : index
    %25 = vector.load %arg8[%c3, %c0_18] : memref<6x128xf32, #tpu.memory_space<vmem>>, vector<1x128xf32>
    %26 = vector.broadcast %25 : vector<1x128xf32> to vector<16x128xf32>
    %27 = arith.addf %24, %26 : vector<16x128xf32>
    %cst_19 = arith.constant 0.000000e+00 : f32
    %28 = vector.broadcast %cst_19 : f32 to vector<16x128xf32>
    %29 = arith.maximumf %27, %28 : vector<16x128xf32>
    %30 = arith.truncf %29 : vector<16x128xf32> to vector<16x128xbf16>
    %c0_20 = arith.constant 0 : index
    %c0_21 = arith.constant 0 : index
    %31 = vector.load %arg6[%c0_20, %c0_21] : memref<128x128xbf16, #tpu.memory_space<vmem>>, vector<128x128xbf16>
    %cst_22 = arith.constant dense<0.000000e+00> : vector<16x128xf32>
    %32 = tpu.matmul %30, %31, %cst_22 {dimension_numbers = #tpu.dot_dimension_numbers<[1], [0], [0], [1], [0, 0, 1, 1], [], []>} : vector<16x128xbf16>, vector<128x128xbf16>, vector<16x128xf32> -> vector<16x128xf32>
    %c4 = arith.constant 4 : index
    %c0_23 = arith.constant 0 : index
    %33 = vector.load %arg8[%c4, %c0_23] : memref<6x128xf32, #tpu.memory_space<vmem>>, vector<1x128xf32>
    %34 = vector.broadcast %33 : vector<1x128xf32> to vector<16x128xf32>
    %35 = arith.addf %32, %34 : vector<16x128xf32>
    %cst_24 = arith.constant 0.000000e+00 : f32
    %36 = vector.broadcast %cst_24 : f32 to vector<16x128xf32>
    %37 = arith.maximumf %35, %36 : vector<16x128xf32>
    %38 = arith.truncf %37 : vector<16x128xf32> to vector<16x128xbf16>
    %c0_25 = arith.constant 0 : index
    %c0_26 = arith.constant 0 : index
    %39 = vector.load %arg7[%c0_25, %c0_26] : memref<128x128xbf16, #tpu.memory_space<vmem>>, vector<128x128xbf16>
    %cst_27 = arith.constant dense<0.000000e+00> : vector<16x128xf32>
    %40 = tpu.matmul %38, %39, %cst_27 {dimension_numbers = #tpu.dot_dimension_numbers<[1], [0], [0], [1], [0, 0, 1, 1], [], []>} : vector<16x128xbf16>, vector<128x128xbf16>, vector<16x128xf32> -> vector<16x128xf32>
    %c5 = arith.constant 5 : index
    %c0_28 = arith.constant 0 : index
    %41 = vector.load %arg8[%c5, %c0_28] : memref<6x128xf32, #tpu.memory_space<vmem>>, vector<1x128xf32>
    %42 = vector.broadcast %41 : vector<1x128xf32> to vector<16x128xf32>
    %43 = arith.addf %40, %42 : vector<16x128xf32>
    %c0_29 = arith.constant 0 : index
    %c0_30 = arith.constant 0 : index
    %44 = vector.load %arg9[%c0_29, %c0_30] : memref<16x128xf32, #tpu.memory_space<vmem>>, vector<16x128xf32>
    tpu.vector_store %arg9[%c0_29, %c0_30], %43 {strides = array<i32>} : memref<16x128xf32, #tpu.memory_space<vmem>>, vector<16x128xf32>,
    return
  }
  func.func @transform_0(%arg0: i32) -> (i32, i32) {
    %c0_i32 = arith.constant 0 : i32
    %c0_i32_0 = arith.constant 0 : i32
    return %arg0, %c0_i32 : i32, i32
  }
  func.func @transform_1(%arg0: i32) -> (i32, i32) {
    %c0_i32 = arith.constant 0 : i32
    %c0_i32_0 = arith.constant 0 : i32
    %c0_i32_1 = arith.constant 0 : i32
    return %c0_i32, %c0_i32_0 : i32, i32
  }
  func.func @transform_2(%arg0: i32) -> (i32, i32) {
    %c0_i32 = arith.constant 0 : i32
    %c0_i32_0 = arith.constant 0 : i32
    %c0_i32_1 = arith.constant 0 : i32
    return %c0_i32, %c0_i32_0 : i32, i32
  }
  func.func @transform_3(%arg0: i32) -> (i32, i32) {
    %c0_i32 = arith.constant 0 : i32
    %c0_i32_0 = arith.constant 0 : i32
    %c0_i32_1 = arith.constant 0 : i32
    return %c0_i32, %c0_i32_0 : i32, i32
  }
  func.func @transform_4(%arg0: i32) -> (i32, i32) {
    %c0_i32 = arith.constant 0 : i32
    %c0_i32_0 = arith.constant 0 : i32
    %c0_i32_1 = arith.constant 0 : i32
    return %c0_i32, %c0_i32_0 : i32, i32
  }
  func.func @transform_5(%arg0: i32) -> (i32, i32) {
    %c0_i32 = arith.constant 0 : i32
    %c0_i32_0 = arith.constant 0 : i32
    %c0_i32_1 = arith.constant 0 : i32
    return %c0_i32, %c0_i32_0 : i32, i32
  }
  func.func @transform_6(%arg0: i32) -> (i32, i32) {
    %c0_i32 = arith.constant 0 : i32
    %c0_i32_0 = arith.constant 0 : i32
    %c0_i32_1 = arith.constant 0 : i32
    return %c0_i32, %c0_i32_0 : i32, i32
  }
  func.func @transform_7(%arg0: i32) -> (i32, i32) {
    %c0_i32 = arith.constant 0 : i32
    %c0_i32_0 = arith.constant 0 : i32
    %c0_i32_1 = arith.constant 0 : i32
    return %c0_i32, %c0_i32_0 : i32, i32
  }
  func.func @transform_8(%arg0: i32) -> (i32, i32) {
    %c0_i32 = arith.constant 0 : i32
    %c0_i32_0 = arith.constant 0 : i32
    return %arg0, %c0_i32 : i32, i32
  }
}

module attributes {stable_mosaic.version = 11 : i64} {
  func.func @autoencoder_kernel(%arg0: i32, %arg1: memref<16x128xbf16, #tpu.memory_space<vmem>>, %arg2: memref<128x128xbf16, #tpu.memory_space<vmem>>, %arg3: memref<128x128xbf16, #tpu.memory_space<vmem>>, %arg4: memref<128x128xbf16, #tpu.memory_space<vmem>>, %arg5: memref<128x128xbf16, #tpu.memory_space<vmem>>, %arg6: memref<128x128xbf16, #tpu.memory_space<vmem>>, %arg7: memref<128x128xbf16, #tpu.memory_space<vmem>>, %arg8: memref<6x128xf32, #tpu.memory_space<vmem>>, %arg9: memref<16x128xf32, #tpu.memory_space<vmem>>) attributes {dimension_semantics = [#tpu.dimension_semantics<parallel>], iteration_bounds = array<i64: 1>, scalar_prefetch = 0 : i64, scratch_operands = 0 : i64, tpu.core_type = #tpu.core_type<tc>, window_params = [{transform_indices = @transform_0, window_bounds = array<i64: 16, 128>}, {pipeline_mode = #tpu.pipeline_mode<synchronous>, transform_indices = @transform_1, window_bounds = array<i64: 128, 128>}, {pipeline_mode = #tpu.pipeline_mode<synchronous>, transform_indices = @transform_2, window_bounds = array<i64: 128, 128>}, {pipeline_mode = #tpu.pipeline_mode<synchronous>, transform_indices = @transform_3, window_bounds = array<i64: 128, 128>}, {pipeline_mode = #tpu.pipeline_mode<synchronous>, transform_indices = @transform_4, window_bounds = array<i64: 128, 128>}, {pipeline_mode = #tpu.pipeline_mode<synchronous>, transform_indices = @transform_5, window_bounds = array<i64: 128, 128>}, {pipeline_mode = #tpu.pipeline_mode<synchronous>, transform_indices = @transform_6, window_bounds = array<i64: 128, 128>}, {pipeline_mode = #tpu.pipeline_mode<synchronous>, transform_indices = @transform_7, window_bounds = array<i64: 6, 128>}, {transform_indices = @transform_8, window_bounds = array<i64: 16, 128>}]} {
    %c0 = arith.constant 0 : index
    %c0_0 = arith.constant 0 : index
    %0 = vector.load %arg1[%c0, %c0_0] : memref<16x128xbf16, #tpu.memory_space<vmem>>, vector<16x128xbf16>
    %c0_1 = arith.constant 0 : index
    %c0_2 = arith.constant 0 : index
    %1 = vector.load %arg2[%c0_1, %c0_2] : memref<128x128xbf16, #tpu.memory_space<vmem>>, vector<128x128xbf16>
    %cst = arith.constant dense<0.000000e+00> : vector<16x128xf32>
    %2 = tpu.matmul %0, %1, %cst {dimension_numbers = #tpu.dot_dimension_numbers<[1], [0], [0], [1], [0, 0, 1, 1], [], []>} : vector<16x128xbf16>, vector<128x128xbf16>, vector<16x128xf32> -> vector<16x128xf32>
    %c0_3 = arith.constant 0 : index
    %c0_4 = arith.constant 0 : index
    %3 = vector.load %arg8[%c0_3, %c0_4] : memref<6x128xf32, #tpu.memory_space<vmem>>, vector<1x128xf32>
    %4 = vector.broadcast %3 : vector<1x128xf32> to vector<16x128xf32>
    %5 = arith.addf %2, %4 : vector<16x128xf32>
    %cst_5 = arith.constant 0.000000e+00 : f32
    %6 = vector.broadcast %cst_5 : f32 to vector<16x128xf32>
    %7 = arith.maximumf %5, %6 : vector<16x128xf32>
    %8 = arith.truncf %7 : vector<16x128xf32> to vector<16x128xbf16>
    %c0_6 = arith.constant 0 : index
    %c0_7 = arith.constant 0 : index
    %9 = vector.load %arg3[%c0_6, %c0_7] : memref<128x128xbf16, #tpu.memory_space<vmem>>, vector<128x128xbf16>
    %cst_8 = arith.constant dense<0.000000e+00> : vector<16x128xf32>
    %10 = tpu.matmul %8, %9, %cst_8 {dimension_numbers = #tpu.dot_dimension_numbers<[1], [0], [0], [1], [0, 0, 1, 1], [], []>} : vector<16x128xbf16>, vector<128x128xbf16>, vector<16x128xf32> -> vector<16x128xf32>
    %c1 = arith.constant 1 : index
    %c0_9 = arith.constant 0 : index
    %11 = vector.load %arg8[%c1, %c0_9] : memref<6x128xf32, #tpu.memory_space<vmem>>, vector<1x128xf32>
    %12 = vector.broadcast %11 : vector<1x128xf32> to vector<16x128xf32>
    %13 = arith.addf %10, %12 : vector<16x128xf32>
    %cst_10 = arith.constant 0.000000e+00 : f32
    %14 = vector.broadcast %cst_10 : f32 to vector<16x128xf32>
    %15 = arith.maximumf %13, %14 : vector<16x128xf32>
    %16 = arith.truncf %15 : vector<16x128xf32> to vector<16x128xbf16>
    %c0_11 = arith.constant 0 : index
    %c0_12 = arith.constant 0 : index
    %17 = vector.load %arg4[%c0_11, %c0_12] : memref<128x128xbf16, #tpu.memory_space<vmem>>, vector<128x128xbf16>
    %cst_13 = arith.constant dense<0.000000e+00> : vector<16x128xf32>
    %18 = tpu.matmul %16, %17, %cst_13 {dimension_numbers = #tpu.dot_dimension_numbers<[1], [0], [0], [1], [0, 0, 1, 1], [], []>} : vector<16x128xbf16>, vector<128x128xbf16>, vector<16x128xf32> -> vector<16x128xf32>
    %c2 = arith.constant 2 : index
    %c0_14 = arith.constant 0 : index
    %19 = vector.load %arg8[%c2, %c0_14] : memref<6x128xf32, #tpu.memory_space<vmem>>, vector<1x128xf32>
    %20 = vector.broadcast %19 : vector<1x128xf32> to vector<16x128xf32>
    %21 = arith.addf %18, %20 : vector<16x128xf32>
    %22 = arith.truncf %21 : vector<16x128xf32> to vector<16x128xbf16>
    %c0_15 = arith.constant 0 : index
    %c0_16 = arith.constant 0 : index
    %23 = vector.load %arg5[%c0_15, %c0_16] : memref<128x128xbf16, #tpu.memory_space<vmem>>, vector<128x128xbf16>
    %cst_17 = arith.constant dense<0.000000e+00> : vector<16x128xf32>
    %24 = tpu.matmul %22, %23, %cst_17 {dimension_numbers = #tpu.dot_dimension_numbers<[1], [0], [0], [1], [0, 0, 1, 1], [], []>} : vector<16x128xbf16>, vector<128x128xbf16>, vector<16x128xf32> -> vector<16x128xf32>
    %c3 = arith.constant 3 : index
    %c0_18 = arith.constant 0 : index
    %25 = vector.load %arg8[%c3, %c0_18] : memref<6x128xf32, #tpu.memory_space<vmem>>, vector<1x128xf32>
    %26 = vector.broadcast %25 : vector<1x128xf32> to vector<16x128xf32>
    %27 = arith.addf %24, %26 : vector<16x128xf32>
    %cst_19 = arith.constant 0.000000e+00 : f32
    %28 = vector.broadcast %cst_19 : f32 to vector<16x128xf32>
    %29 = arith.maximumf %27, %28 : vector<16x128xf32>
    %30 = arith.truncf %29 : vector<16x128xf32> to vector<16x128xbf16>
    %c0_20 = arith.constant 0 : index
    %c0_21 = arith.constant 0 : index
    %31 = vector.load %arg6[%c0_20, %c0_21] : memref<128x128xbf16, #tpu.memory_space<vmem>>, vector<128x128xbf16>
    %cst_22 = arith.constant dense<0.000000e+00> : vector<16x128xf32>
    %32 = tpu.matmul %30, %31, %cst_22 {dimension_numbers = #tpu.dot_dimension_numbers<[1], [0], [0], [1], [0, 0, 1, 1], [], []>} : vector<16x128xbf16>, vector<128x128xbf16>, vector<16x128xf32> -> vector<16x128xf32>
    %c4 = arith.constant 4 : index
    %c0_23 = arith.constant 0 : index
    %33 = vector.load %arg8[%c4, %c0_23] : memref<6x128xf32, #tpu.memory_space<vmem>>, vector<1x128xf32>
    %34 = vector.broadcast %33 : vector<1x128xf32> to vector<16x128xf32>
    %35 = arith.addf %32, %34 : vector<16x128xf32>
    %cst_24 = arith.constant 0.000000e+00 : f32
    %36 = vector.broadcast %cst_24 : f32 to vector<16x128xf32>
    %37 = arith.maximumf %35, %36 : vector<16x128xf32>
    %38 = arith.truncf %37 : vector<16x128xf32> to vector<16x128xbf16>
    %c0_25 = arith.constant 0 : index
    %c0_26 = arith.constant 0 : index
    %39 = vector.load %arg7[%c0_25, %c0_26] : memref<128x128xbf16, #tpu.memory_space<vmem>>, vector<128x128xbf16>
    %cst_27 = arith.constant dense<0.000000e+00> : vector<16x128xf32>
    %40 = tpu.matmul %38, %39, %cst_27 {dimension_numbers = #tpu.dot_dimension_numbers<[1], [0], [0], [1], [0, 0, 1, 1], [], []>} : vector<16x128xbf16>, vector<128x128xbf16>, vector<16x128xf32> -> vector<16x128xf32>
    %c5 = arith.constant 5 : index
    %c0_28 = arith.constant 0 : index
    %41 = vector.load %arg8[%c5, %c0_28] : memref<6x128xf32, #tpu.memory_space<vmem>>, vector<1x128xf32>
    %42 = vector.broadcast %41 : vector<1x128xf32> to vector<16x128xf32>
    %43 = arith.addf %40, %42 : vector<16x128xf32>
    %c0_29 = arith.constant 0 : index
    %c0_30 = arith.constant 0 : index
    %44 = vector.load %arg9[%c0_29, %c0_30] : memref<16x128xf32, #tpu.memory_space<vmem>>, vector<16x128xf32>
    tpu.vector_store %arg9[%c0_29, %c0_30], %43 {strides = array<i32>} : memref<16x128xf32, #tpu.memory_space<vmem>>, vector<16x128xf32>,
    return
  }
  func.func @transform_0(%arg0: i32) -> (i32, i32) {
    %c0_i32 = arith.constant 0 : i32
    %c0_i32_0 = arith.constant 0 : i32
    return %arg0, %c0_i32 : i32, i32
  }
  func.func @transform_1(%arg0: i32) -> (i32, i32) {
    %c0_i32 = arith.constant 0 : i32
    %c0_i32_0 = arith.constant 0 : i32
    %c0_i32_1 = arith.constant 0 : i32
    return %c0_i32, %c0_i32_0 : i32, i32
  }
  func.func @transform_2(%arg0: i32) -> (i32, i32) {
    %c0_i32 = arith.constant 0 : i32
    %c0_i32_0 = arith.constant 0 : i32
    %c0_i32_1 = arith.constant 0 : i32
    return %c0_i32, %c0_i32_0 : i32, i32
  }
  func.func @transform_3(%arg0: i32) -> (i32, i32) {
    %c0_i32 = arith.constant 0 : i32
    %c0_i32_0 = arith.constant 0 : i32
    %c0_i32_1 = arith.constant 0 : i32
    return %c0_i32, %c0_i32_0 : i32, i32
  }
  func.func @transform_4(%arg0: i32) -> (i32, i32) {
    %c0_i32 = arith.constant 0 : i32
    %c0_i32_0 = arith.constant 0 : i32
    %c0_i32_1 = arith.constant 0 : i32
    return %c0_i32, %c0_i32_0 : i32, i32
  }
  func.func @transform_5(%arg0: i32) -> (i32, i32) {
    %c0_i32 = arith.constant 0 : i32
    %c0_i32_0 = arith.constant 0 : i32
    %c0_i32_1 = arith.constant 0 : i32
    return %c0_i32, %c0_i32_0 : i32, i32
  }
  func.func @transform_6(%arg0: i32) -> (i32, i32) {
    %c0_i32 = arith.constant 0 : i32
    %c0_i32_0 = arith.constant 0 : i32
    %c0_i32_1 = arith.constant 0 : i32
    return %c0_i32, %c0_i32_0 : i32, i32
  }
  func.func @transform_7(%arg0: i32) -> (i32, i32) {
    %c0_i32 = arith.constant 0 : i32
    %c0_i32_0 = arith.constant 0 : i32
    %c0_i32_1 = arith.constant 0 : i32
    return %c0_i32, %c0_i32_0 : i32, i32
  }
  func.func @transform_8(%arg0: i32) -> (i32, i32) {
    %c0_i32 = arith.constant 0 : i32
    %c0_i32_0 = arith.constant 0 : i32
    return %arg0, %c0_i32 : i32, i32
  }
}

</mosaic_0001>

<llo_original>
// kernel: tpu_custom_call.1
$region0: #{tpu_custom_call.1}
  #allocation0 [shape = 'u32[]', space=smem, size = 0x4, offset = 0x4, fixed_abs, tag = 'smem constant byte address 0x4 - core index']
  #allocation1 [shape = 'u32[144,128]{1,0:T(1,128)}', space=vmem, size = 0x12000, scoped, tag = 'internal scratch']
  %s0 = inlined_call_operand.hbm [shape: bf16[16,128], index: 0, kind: input, shape index: {}]
  %s1 = inlined_call_operand.hbm [shape: bf16[128,128], index: 1, kind: input, shape index: {}]
  %s2 = inlined_call_operand.hbm [shape: bf16[128,128], index: 2, kind: input, shape index: {}]
  %s3 = inlined_call_operand.hbm [shape: bf16[128,128], index: 3, kind: input, shape index: {}]
  %s4 = inlined_call_operand.hbm [shape: bf16[128,128], index: 4, kind: input, shape index: {}]
  %s5 = inlined_call_operand.hbm [shape: bf16[128,128], index: 5, kind: input, shape index: {}]
  %s6 = inlined_call_operand.hbm [shape: bf16[128,128], index: 6, kind: input, shape index: {}]
  %s7 = inlined_call_operand.vmem [shape: f32[6,128], index: 7, kind: input, shape index: {}]
  %s8 = inlined_call_operand.hbm [shape: f32[16,128], index: 8, kind: output, shape index: {}]
  %s9 = sld [smem:[#allocation0]]
  $region70: #{tpu_custom_call.1} parent=0
    _
  %s11 = ssub.s32 1, %s9
  %s12 = scalar_select 0, %s11, %s9
  $region1: #{tpu_custom_call.1} parent=0
    #allocation2 [shape = 'u8[4096]{0}', space=vmem, size = 0x1000, scoped, tag = 'input window, operand 0, single buffered']
    #allocation3 [shape = 's32[1]{0}', space=sflag, size = 0x4, scoped, tag = 'scoped memory for tpu_custom_call.1']
    #allocation4 [shape = 's32[1]{0}', space=sflag, size = 0x4, scoped, tag = 'scoped memory for tpu_custom_call.1']
    #allocation5 [shape = 'u8[32768]{0}', space=vmem, size = 0x8000, scoped, tag = 'input window, operand 1, single buffered']
    #allocation6 [shape = 's32[1]{0}', space=sflag, size = 0x4, scoped, tag = 'scoped memory for tpu_custom_call.1']
    #allocation7 [shape = 'u8[32768]{0}', space=vmem, size = 0x8000, scoped, tag = 'input window, operand 2, single buffered']
    #allocation8 [shape = 'u8[32768]{0}', space=vmem, size = 0x8000, scoped, tag = 'input window, operand 3, single buffered']
    #allocation9 [shape = 's32[1]{0}', space=sflag, size = 0x4, scoped, tag = 'scoped memory for tpu_custom_call.1']
    #allocation10 [shape = 'u8[32768]{0}', space=vmem, size = 0x8000, scoped, tag = 'input window, operand 4, single buffered']
    #allocation11 [shape = 'u8[32768]{0}', space=vmem, size = 0x8000, scoped, tag = 'input window, operand 5, single buffered']
    #allocation12 [shape = 's32[1]{0}', space=sflag, size = 0x4, scoped, tag = 'scoped memory for tpu_custom_call.1']
    #allocation13 [shape = 'u8[32768]{0}', space=vmem, size = 0x8000, scoped, tag = 'input window, operand 6, single buffered']
    #allocation14 [shape = 'u8[8192]{0}', space=vmem, size = 0x2000, scoped, tag = 'output window, operand 0, single buffered']
    %13 = vsyncpa [#allocation3], 0
    %14 = vsyncpa [#allocation6], 0
    %15 = vsyncpa [#allocation9], 0
    %16 = vsyncpa [#allocation12], 0
    %17 = vsyncpa [#allocation4], 0
    // Predicated region
    $region2: #{tpu_custom_call.1} parent=1 // pred_check
      _
    $region3: #{tpu_custom_call.1} parent=1 // pred_check_branch
      %19 = sbr.rel (0) target = $region5
    $region4: #{tpu_custom_call.1} parent=1 // pred_region
      %s21 = ssub.s32 128, 128
      %22 = vsyncadd [#allocation3], %s21
      %s23 = sshll.u32 [#allocation2], 4
      %s24 = int_to_ptr.vmem [resolvable:$true] %s23
      %29 = dma.hbm_to_vmem [thread:$0]  %s0, 128, %s24, [#allocation3], 64, 64, 4
    $region5: #{tpu_custom_call.1} parent=1 // pred_fallthru
      _
    // Predicated region
    $region6: #{tpu_custom_call.1} parent=1 // pred_check
      _
    $region7: #{tpu_custom_call.1} parent=1 // pred_check_branch
      %31 = sbr.rel (0) target = $region9
    $region8: #{tpu_custom_call.1} parent=1 // pred_region
      %s33 = ssub.s32 1024, 1024
      %34 = vsyncadd [#allocation6], %s33
      %s35 = sshll.u32 [#allocation5], 4
      %s36 = int_to_ptr.vmem [resolvable:$true] %s35
      %41 = dma.hbm_to_vmem [thread:$0]  %s1, 1024, %s36, [#allocation6], 64, 64, 4
    $region9: #{tpu_custom_call.1} parent=1 // pred_fallthru
      _
    // Predicated region
    $region10: #{tpu_custom_call.1} parent=1 // pred_check
      _
    $region11: #{tpu_custom_call.1} parent=1 // pred_check_branch
      %43 = sbr.rel (0) target = $region13
    $region12: #{tpu_custom_call.1} parent=1 // pred_region
      %s45 = ssub.s32 1024, 1024
      %46 = vsyncadd [#allocation6], %s45
      %s47 = sshll.u32 [#allocation7], 4
      %s48 = int_to_ptr.vmem [resolvable:$true] %s47
      %53 = dma.hbm_to_vmem [thread:$0]  %s2, 1024, %s48, [#allocation6], 64, 64, 4
    $region13: #{tpu_custom_call.1} parent=1 // pred_fallthru
      _
    // Predicated region
    $region14: #{tpu_custom_call.1} parent=1 // pred_check
      _
    $region15: #{tpu_custom_call.1} parent=1 // pred_check_branch
      %55 = sbr.rel (0) target = $region17
    $region16: #{tpu_custom_call.1} parent=1 // pred_region
      %s57 = ssub.s32 1024, 1024
      %58 = vsyncadd [#allocation9], %s57
      %s59 = sshll.u32 [#allocation8], 4
      %s60 = int_to_ptr.vmem [resolvable:$true] %s59
      %65 = dma.hbm_to_vmem [thread:$0]  %s3, 1024, %s60, [#allocation9], 64, 64, 4
    $region17: #{tpu_custom_call.1} parent=1 // pred_fallthru
      _
    // Predicated region
    $region18: #{tpu_custom_call.1} parent=1 // pred_check
      _
    $region19: #{tpu_custom_call.1} parent=1 // pred_check_branch
      %67 = sbr.rel (0) target = $region21
    $region20: #{tpu_custom_call.1} parent=1 // pred_region
      %s69 = ssub.s32 1024, 1024
      %70 = vsyncadd [#allocation9], %s69
      %s71 = sshll.u32 [#allocation10], 4
      %s72 = int_to_ptr.vmem [resolvable:$true] %s71
      %77 = dma.hbm_to_vmem [thread:$0]  %s4, 1024, %s72, [#allocation9], 64, 64, 4
    $region21: #{tpu_custom_call.1} parent=1 // pred_fallthru
      _
    // Predicated region
    $region22: #{tpu_custom_call.1} parent=1 // pred_check
      _
    $region23: #{tpu_custom_call.1} parent=1 // pred_check_branch
      %79 = sbr.rel (0) target = $region25
    $region24: #{tpu_custom_call.1} parent=1 // pred_region
      %s81 = ssub.s32 1024, 1024
      %82 = vsyncadd [#allocation12], %s81
      %s83 = sshll.u32 [#allocation11], 4
      %s84 = int_to_ptr.vmem [resolvable:$true] %s83
      %89 = dma.hbm_to_vmem [thread:$0]  %s5, 1024, %s84, [#allocation12], 64, 64, 4
    $region25: #{tpu_custom_call.1} parent=1 // pred_fallthru
      _
    // Predicated region
    $region26: #{tpu_custom_call.1} parent=1 // pred_check
      _
    $region27: #{tpu_custom_call.1} parent=1 // pred_check_branch
      %91 = sbr.rel (0) target = $region29
    $region28: #{tpu_custom_call.1} parent=1 // pred_region
      %s93 = ssub.s32 1024, 1024
      %94 = vsyncadd [#allocation12], %s93
      %s95 = sshll.u32 [#allocation13], 4
      %s96 = int_to_ptr.vmem [resolvable:$true] %s95
      %101 = dma.hbm_to_vmem [thread:$0]  %s6, 1024, %s96, [#allocation12], 64, 64, 4
    $region29: #{tpu_custom_call.1} parent=1 // pred_fallthru
      _
    // Predicated region
    $region30: #{tpu_custom_call.1} parent=1 // pred_check
      _
    $region31: #{tpu_custom_call.1} parent=1 // pred_check_branch
      %103 = sbr.rel (0) target = $region33
    $region32: #{tpu_custom_call.1} parent=1 // pred_region
      _
    $region33: #{tpu_custom_call.1} parent=1 // pred_fallthru
      _
    // Predicated region
    $region34: #{tpu_custom_call.1} parent=1 // pred_check
      _
    $region35: #{tpu_custom_call.1} parent=1 // pred_check_branch
      %105 = sbr.rel (0) target = $region37
    $region36: #{tpu_custom_call.1} parent=1 // pred_region
      %106 = dma.done [#allocation3], 128
    $region37: #{tpu_custom_call.1} parent=1 // pred_fallthru
      _
    // Predicated region
    $region38: #{tpu_custom_call.1} parent=1 // pred_check
      _
    $region39: #{tpu_custom_call.1} parent=1 // pred_check_branch
      %108 = sbr.rel (0) target = $region41
    $region40: #{tpu_custom_call.1} parent=1 // pred_region
      %109 = dma.done [#allocation6], 1024
    $region41: #{tpu_custom_call.1} parent=1 // pred_fallthru
      _
    // Predicated region
    $region42: #{tpu_custom_call.1} parent=1 // pred_check
      _
    $region43: #{tpu_custom_call.1} parent=1 // pred_check_branch
      %111 = sbr.rel (0) target = $region45
    $region44: #{tpu_custom_call.1} parent=1 // pred_region
      %112 = dma.done [#allocation6], 1024
    $region45: #{tpu_custom_call.1} parent=1 // pred_fallthru
      _
    // Predicated region
    $region46: #{tpu_custom_call.1} parent=1 // pred_check
      _
    $region47: #{tpu_custom_call.1} parent=1 // pred_check_branch
      %114 = sbr.rel (0) target = $region49
    $region48: #{tpu_custom_call.1} parent=1 // pred_region
      %115 = dma.done [#allocation9], 1024
    $region49: #{tpu_custom_call.1} parent=1 // pred_fallthru
      _
    // Predicated region
    $region50: #{tpu_custom_call.1} parent=1 // pred_check
      _
    $region51: #{tpu_custom_call.1} parent=1 // pred_check_branch
      %117 = sbr.rel (0) target = $region53
    $region52: #{tpu_custom_call.1} parent=1 // pred_region
      %118 = dma.done [#allocation9], 1024
    $region53: #{tpu_custom_call.1} parent=1 // pred_fallthru
      _
    // Predicated region
    $region54: #{tpu_custom_call.1} parent=1 // pred_check
      _
    $region55: #{tpu_custom_call.1} parent=1 // pred_check_branch
      %120 = sbr.rel (0) target = $region57
    $region56: #{tpu_custom_call.1} parent=1 // pred_region
      %121 = dma.done [#allocation12], 1024
    $region57: #{tpu_custom_call.1} parent=1 // pred_fallthru
      _
    // Predicated region
    $region58: #{tpu_custom_call.1} parent=1 // pred_check
      _
    $region59: #{tpu_custom_call.1} parent=1 // pred_check_branch
      %123 = sbr.rel (0) target = $region61
    $region60: #{tpu_custom_call.1} parent=1 // pred_region
      %124 = dma.done [#allocation12], 1024
    $region61: #{tpu_custom_call.1} parent=1 // pred_fallthru
      _
    %v126 = vld [vmem:[#allocation2] sm:$0xf]
    %v127 = vld [vmem:[#allocation2 + $0x4] sm:$0xf]
    %v128 = vld [vmem:[#allocation5] sm:$0xf]
    %v129 = vld [vmem:[#allocation5 + $0x4] sm:$0xf]
    %v130 = vld [vmem:[#allocation5 + $0x8] sm:$0xf]
    %v131 = vld [vmem:[#allocation5 + $0xc] sm:$0xf]
    %v132 = vld [vmem:[#allocation5 + $0x10] sm:$0xf]
    %v133 = vld [vmem:[#allocation5 + $0x14] sm:$0xf]
    %v134 = vld [vmem:[#allocation5 + $0x18] sm:$0xf]
    %v135 = vld [vmem:[#allocation5 + $0x1c] sm:$0xf]
    %v136 = vld [vmem:[#allocation5 + $0x20] sm:$0xf]
    %v137 = vld [vmem:[#allocation5 + $0x24] sm:$0xf]
    %v138 = vld [vmem:[#allocation5 + $0x28] sm:$0xf]
    %v139 = vld [vmem:[#allocation5 + $0x2c] sm:$0xf]
    %v140 = vld [vmem:[#allocation5 + $0x30] sm:$0xf]
    %v141 = vld [vmem:[#allocation5 + $0x34] sm:$0xf]
    %v142 = vld [vmem:[#allocation5 + $0x38] sm:$0xf]
    %v143 = vld [vmem:[#allocation5 + $0x3c] sm:$0xf]
    %v144 = vld [vmem:[%s7] sm:$0x1]
    %v145 = vlaneseq
    %v146 = vshrl.u32 %v145, 7
    %v147 = vsub.s32 0, %v146
    %v148 = vrot.slane %v144, %v147
    %v151 = vunpack.c.l.b16 %v126
    %v152 = vunpack.c.l.b16 %v127
    %v153 = vpack.c.b16 %v152, %v151
    %v171 = vunpack.c.l.b16 %v128
    %v172 = vunpack.c.l.b16 %v129
    %v173 = vunpack.c.l.b16 %v130
    %v174 = vunpack.c.l.b16 %v131
    %v175 = vunpack.c.l.b16 %v132
    %v176 = vunpack.c.l.b16 %v133
    %v177 = vunpack.c.l.b16 %v134
    %v178 = vunpack.c.l.b16 %v135
    %v179 = vunpack.c.l.b16 %v136
    %v180 = vunpack.c.l.b16 %v137
    %v181 = vunpack.c.l.b16 %v138
    %v182 = vunpack.c.l.b16 %v139
    %v183 = vunpack.c.l.b16 %v140
    %v184 = vunpack.c.l.b16 %v141
    %v185 = vunpack.c.l.b16 %v142
    %v186 = vunpack.c.l.b16 %v143
    %v187 = vpack.c.b16 %v172, %v171
    %v188 = vpack.c.b16 %v174, %v173
    %v189 = vpack.c.b16 %v176, %v175
    %v190 = vpack.c.b16 %v178, %v177
    %v191 = vpack.c.b16 %v180, %v179
    %v192 = vpack.c.b16 %v182, %v181
    %v193 = vpack.c.b16 %v184, %v183
    %v194 = vpack.c.b16 %v186, %v185
    %203 = vmatprep.subr.bf16.mxu0 0
    %204 = vmatpush1.bf16.msra.mxu0 %v187
    %205 = vmatprep.subr.bf16.mxu0 0
    %206 = vmatpush1.bf16.msra.mxu0 %v188
    %207 = vmatprep.subr.bf16.mxu0 0
    %208 = vmatpush1.bf16.msra.mxu0 %v189
    %209 = vmatprep.subr.bf16.mxu0 0
    %210 = vmatpush1.bf16.msra.mxu0 %v190
    %211 = vmatprep.subr.bf16.mxu0 0
    %212 = vmatpush1.bf16.msra.mxu0 %v191
    %213 = vmatprep.subr.bf16.mxu0 0
    %214 = vmatpush1.bf16.msra.mxu0 %v192
    %215 = vmatprep.subr.bf16.mxu0 0
    %216 = vmatpush1.bf16.msra.mxu0 %v193
    %217 = vmatprep.subr.bf16.mxu0 0
    %218 = vmatpush1.bf16.msra.mxu0 %v194
    %219 = vmatprep.subr.bf16.mxu0 0
    %220 = vmatpush1.bf16.msra.mxu0 0
    %221 = vmatprep.subr.bf16.mxu0 0
    %222 = vmatpush1.bf16.msra.mxu0 0
    %223 = vmatprep.subr.bf16.mxu0 0
    %224 = vmatpush1.bf16.msra.mxu0 0
    %225 = vmatprep.subr.bf16.mxu0 0
    %226 = vmatpush1.bf16.msra.mxu0 0
    %227 = vmatprep.subr.bf16.mxu0 0
    %228 = vmatpush1.bf16.msra.mxu0 0
    %229 = vmatprep.subr.bf16.mxu0 0
    %230 = vmatpush1.bf16.msra.mxu0 0
    %231 = vmatprep.subr.bf16.mxu0 0
    %232 = vmatpush1.bf16.msra.mxu0 0
    %233 = vmatprep.subr.bf16.mxu0 0
    %234 = vmatpush1.bf16.msra.mxu0 0
    %235 = vmatprep.mubr.bf16.mxu0 0
    %236 = vmatmul.mubr.bf16.gmra.mrb[0].mxu0 %v153
    %v237 = vpop.f32.mrb[0].mxu0
    %v238 = vadd.f32 %v148, %v237
    %v239 = vpop.f32.mrb[0].mxu0
    %v240 = vpop.f32.mrb[0].mxu0
    %v241 = vadd.f32 %v148, %v240
    %v242 = vpop.f32.mrb[0].mxu0
    %243 = vdwg.mxu0
    %v244 = vmax.f32 %v238, 0.0
    %v245 = vmax.f32 %v241, 0.0
    %v246 = vpack.c.bf16 %v245, %v244
    %v247 = vld [vmem:[#allocation7] sm:$0xf]
    %v248 = vld [vmem:[#allocation7 + $0x4] sm:$0xf]
    %v249 = vld [vmem:[#allocation7 + $0x8] sm:$0xf]
    %v250 = vld [vmem:[#allocation7 + $0xc] sm:$0xf]
    %v251 = vld [vmem:[#allocation7 + $0x10] sm:$0xf]
    %v252 = vld [vmem:[#allocation7 + $0x14] sm:$0xf]
    %v253 = vld [vmem:[#allocation7 + $0x18] sm:$0xf]
    %v254 = vld [vmem:[#allocation7 + $0x1c] sm:$0xf]
    %v255 = vld [vmem:[#allocation7 + $0x20] sm:$0xf]
    %v256 = vld [vmem:[#allocation7 + $0x24] sm:$0xf]
    %v257 = vld [vmem:[#allocation7 + $0x28] sm:$0xf]
    %v258 = vld [vmem:[#allocation7 + $0x2c] sm:$0xf]
    %v259 = vld [vmem:[#allocation7 + $0x30] sm:$0xf]
    %v260 = vld [vmem:[#allocation7 + $0x34] sm:$0xf]
    %v261 = vld [vmem:[#allocation7 + $0x38] sm:$0xf]
    %v262 = vld [vmem:[#allocation7 + $0x3c] sm:$0xf]
    %v263 = vld [vmem:[%s7 + $0x1] sm:$0x1]
    %v264 = vlaneseq
    %v265 = vshrl.u32 %v264, 7
    %v266 = vsub.s32 0, %v265
    %v267 = vrot.slane %v263, %v266
    %v284 = vunpack.c.l.b16 %v247
    %v285 = vunpack.c.l.b16 %v248
    %v286 = vunpack.c.l.b16 %v249
    %v287 = vunpack.c.l.b16 %v250
    %v288 = vunpack.c.l.b16 %v251
    %v289 = vunpack.c.l.b16 %v252
    %v290 = vunpack.c.l.b16 %v253
    %v291 = vunpack.c.l.b16 %v254
    %v292 = vunpack.c.l.b16 %v255
    %v293 = vunpack.c.l.b16 %v256
    %v294 = vunpack.c.l.b16 %v257
    %v295 = vunpack.c.l.b16 %v258
    %v296 = vunpack.c.l.b16 %v259
    %v297 = vunpack.c.l.b16 %v260
    %v298 = vunpack.c.l.b16 %v261
    %v299 = vunpack.c.l.b16 %v262
    %v300 = vpack.c.b16 %v285, %v284
    %v301 = vpack.c.b16 %v287, %v286
    %v302 = vpack.c.b16 %v289, %v288
    %v303 = vpack.c.b16 %v291, %v290
    %v304 = vpack.c.b16 %v293, %v292
    %v305 = vpack.c.b16 %v295, %v294
    %v306 = vpack.c.b16 %v297, %v296
    %v307 = vpack.c.b16 %v299, %v298
    %316 = vmatprep.subr.bf16.mxu0 0
    %317 = vmatpush1.bf16.msra.mxu0 %v300
    %318 = vmatprep.subr.bf16.mxu0 0
    %319 = vmatpush1.bf16.msra.mxu0 %v301
    %320 = vmatprep.subr.bf16.mxu0 0
    %321 = vmatpush1.bf16.msra.mxu0 %v302
    %322 = vmatprep.subr.bf16.mxu0 0
    %323 = vmatpush1.bf16.msra.mxu0 %v303
    %324 = vmatprep.subr.bf16.mxu0 0
    %325 = vmatpush1.bf16.msra.mxu0 %v304
    %326 = vmatprep.subr.bf16.mxu0 0
    %327 = vmatpush1.bf16.msra.mxu0 %v305
    %328 = vmatprep.subr.bf16.mxu0 0
    %329 = vmatpush1.bf16.msra.mxu0 %v306
    %330 = vmatprep.subr.bf16.mxu0 0
    %331 = vmatpush1.bf16.msra.mxu0 %v307
    %332 = vmatprep.subr.bf16.mxu0 0
    %333 = vmatpush1.bf16.msra.mxu0 0
    %334 = vmatprep.subr.bf16.mxu0 0
    %335 = vmatpush1.bf16.msra.mxu0 0
    %336 = vmatprep.subr.bf16.mxu0 0
    %337 = vmatpush1.bf16.msra.mxu0 0
    %338 = vmatprep.subr.bf16.mxu0 0
    %339 = vmatpush1.bf16.msra.mxu0 0
    %340 = vmatprep.subr.bf16.mxu0 0
    %341 = vmatpush1.bf16.msra.mxu0 0
    %342 = vmatprep.subr.bf16.mxu0 0
    %343 = vmatpush1.bf16.msra.mxu0 0
    %344 = vmatprep.subr.bf16.mxu0 0
    %345 = vmatpush1.bf16.msra.mxu0 0
    %346 = vmatprep.subr.bf16.mxu0 0
    %347 = vmatpush1.bf16.msra.mxu0 0
    %348 = vmatprep.mubr.bf16.mxu0 0
    %349 = vmatmul.mubr.bf16.gmra.mrb[0].mxu0 %v246
    %v350 = vpop.f32.mrb[0].mxu0
    %v351 = vadd.f32 %v267, %v350
    %v352 = vpop.f32.mrb[0].mxu0
    %v353 = vpop.f32.mrb[0].mxu0
    %v354 = vadd.f32 %v267, %v353
    %v355 = vpop.f32.mrb[0].mxu0
    %356 = vdwg.mxu0
    %v357 = vmax.f32 %v351, 0.0
    %v358 = vmax.f32 %v354, 0.0
    %v359 = vpack.c.bf16 %v358, %v357
    %v360 = vld [vmem:[#allocation8] sm:$0xf]
    %v361 = vld [vmem:[#allocation8 + $0x4] sm:$0xf]
    %v362 = vld [vmem:[#allocation8 + $0x8] sm:$0xf]
    %v363 = vld [vmem:[#allocation8 + $0xc] sm:$0xf]
    %v364 = vld [vmem:[#allocation8 + $0x10] sm:$0xf]
    %v365 = vld [vmem:[#allocation8 + $0x14] sm:$0xf]
    %v366 = vld [vmem:[#allocation8 + $0x18] sm:$0xf]
    %v367 = vld [vmem:[#allocation8 + $0x1c] sm:$0xf]
    %v368 = vld [vmem:[#allocation8 + $0x20] sm:$0xf]
    %v369 = vld [vmem:[#allocation8 + $0x24] sm:$0xf]
    %v370 = vld [vmem:[#allocation8 + $0x28] sm:$0xf]
    %v371 = vld [vmem:[#allocation8 + $0x2c] sm:$0xf]
    %v372 = vld [vmem:[#allocation8 + $0x30] sm:$0xf]
    %v373 = vld [vmem:[#allocation8 + $0x34] sm:$0xf]
    %v374 = vld [vmem:[#allocation8 + $0x38] sm:$0xf]
    %v375 = vld [vmem:[#allocation8 + $0x3c] sm:$0xf]
    %v376 = vld [vmem:[%s7 + $0x2] sm:$0x1]
    %v377 = vlaneseq
    %v378 = vshrl.u32 %v377, 7
    %v379 = vsub.s32 0, %v378
    %v380 = vrot.slane %v376, %v379
    %v397 = vunpack.c.l.b16 %v360
    %v398 = vunpack.c.l.b16 %v361
    %v399 = vunpack.c.l.b16 %v362
    %v400 = vunpack.c.l.b16 %v363
    %v401 = vunpack.c.l.b16 %v364
    %v402 = vunpack.c.l.b16 %v365
    %v403 = vunpack.c.l.b16 %v366
    %v404 = vunpack.c.l.b16 %v367
    %v405 = vunpack.c.l.b16 %v368
    %v406 = vunpack.c.l.b16 %v369
    %v407 = vunpack.c.l.b16 %v370
    %v408 = vunpack.c.l.b16 %v371
    %v409 = vunpack.c.l.b16 %v372
    %v410 = vunpack.c.l.b16 %v373
    %v411 = vunpack.c.l.b16 %v374
    %v412 = vunpack.c.l.b16 %v375
    %v413 = vpack.c.b16 %v398, %v397
    %v414 = vpack.c.b16 %v400, %v399
    %v415 = vpack.c.b16 %v402, %v401
    %v416 = vpack.c.b16 %v404, %v403
    %v417 = vpack.c.b16 %v406, %v405
    %v418 = vpack.c.b16 %v408, %v407
    %v419 = vpack.c.b16 %v410, %v409
    %v420 = vpack.c.b16 %v412, %v411
    %429 = vmatprep.subr.bf16.mxu0 0
    %430 = vmatpush1.bf16.msra.mxu0 %v413
    %431 = vmatprep.subr.bf16.mxu0 0
    %432 = vmatpush1.bf16.msra.mxu0 %v414
    %433 = vmatprep.subr.bf16.mxu0 0
    %434 = vmatpush1.bf16.msra.mxu0 %v415
    %435 = vmatprep.subr.bf16.mxu0 0
    %436 = vmatpush1.bf16.msra.mxu0 %v416
    %437 = vmatprep.subr.bf16.mxu0 0
    %438 = vmatpush1.bf16.msra.mxu0 %v417
    %439 = vmatprep.subr.bf16.mxu0 0
    %440 = vmatpush1.bf16.msra.mxu0 %v418
    %441 = vmatprep.subr.bf16.mxu0 0
    %442 = vmatpush1.bf16.msra.mxu0 %v419
    %443 = vmatprep.subr.bf16.mxu0 0
    %444 = vmatpush1.bf16.msra.mxu0 %v420
    %445 = vmatprep.subr.bf16.mxu0 0
    %446 = vmatpush1.bf16.msra.mxu0 0
    %447 = vmatprep.subr.bf16.mxu0 0
    %448 = vmatpush1.bf16.msra.mxu0 0
    %449 = vmatprep.subr.bf16.mxu0 0
    %450 = vmatpush1.bf16.msra.mxu0 0
    %451 = vmatprep.subr.bf16.mxu0 0
    %452 = vmatpush1.bf16.msra.mxu0 0
    %453 = vmatprep.subr.bf16.mxu0 0
    %454 = vmatpush1.bf16.msra.mxu0 0
    %455 = vmatprep.subr.bf16.mxu0 0
    %456 = vmatpush1.bf16.msra.mxu0 0
    %457 = vmatprep.subr.bf16.mxu0 0
    %458 = vmatpush1.bf16.msra.mxu0 0
    %459 = vmatprep.subr.bf16.mxu0 0
    %460 = vmatpush1.bf16.msra.mxu0 0
    %461 = vmatprep.mubr.bf16.mxu0 0
    %462 = vmatmul.mubr.bf16.gmra.mrb[0].mxu0 %v359
    %v463 = vpop.f32.mrb[0].mxu0
    %v464 = vadd.f32 %v380, %v463
    %v465 = vpop.f32.mrb[0].mxu0
    %v466 = vpop.f32.mrb[0].mxu0
    %v467 = vadd.f32 %v380, %v466
    %v468 = vpop.f32.mrb[0].mxu0
    %469 = vdwg.mxu0
    %v470 = vpack.c.bf16 %v467, %v464
    %v471 = vld [vmem:[#allocation10] sm:$0xf]
    %v472 = vld [vmem:[#allocation10 + $0x4] sm:$0xf]
    %v473 = vld [vmem:[#allocation10 + $0x8] sm:$0xf]
    %v474 = vld [vmem:[#allocation10 + $0xc] sm:$0xf]
    %v475 = vld [vmem:[#allocation10 + $0x10] sm:$0xf]
    %v476 = vld [vmem:[#allocation10 + $0x14] sm:$0xf]
    %v477 = vld [vmem:[#allocation10 + $0x18] sm:$0xf]
    %v478 = vld [vmem:[#allocation10 + $0x1c] sm:$0xf]
    %v479 = vld [vmem:[#allocation10 + $0x20] sm:$0xf]
    %v480 = vld [vmem:[#allocation10 + $0x24] sm:$0xf]
    %v481 = vld [vmem:[#allocation10 + $0x28] sm:$0xf]
    %v482 = vld [vmem:[#allocation10 + $0x2c] sm:$0xf]
    %v483 = vld [vmem:[#allocation10 + $0x30] sm:$0xf]
    %v484 = vld [vmem:[#allocation10 + $0x34] sm:$0xf]
    %v485 = vld [vmem:[#allocation10 + $0x38] sm:$0xf]
    %v486 = vld [vmem:[#allocation10 + $0x3c] sm:$0xf]
    %v487 = vld [vmem:[%s7 + $0x3] sm:$0x1]
    %v488 = vlaneseq
    %v489 = vshrl.u32 %v488, 7
    %v490 = vsub.s32 0, %v489
    %v491 = vrot.slane %v487, %v490
    %v508 = vunpack.c.l.b16 %v471
    %v509 = vunpack.c.l.b16 %v472
    %v510 = vunpack.c.l.b16 %v473
    %v511 = vunpack.c.l.b16 %v474
    %v512 = vunpack.c.l.b16 %v475
    %v513 = vunpack.c.l.b16 %v476
    %v514 = vunpack.c.l.b16 %v477
    %v515 = vunpack.c.l.b16 %v478
    %v516 = vunpack.c.l.b16 %v479
    %v517 = vunpack.c.l.b16 %v480
    %v518 = vunpack.c.l.b16 %v481
    %v519 = vunpack.c.l.b16 %v482
    %v520 = vunpack.c.l.b16 %v483
    %v521 = vunpack.c.l.b16 %v484
    %v522 = vunpack.c.l.b16 %v485
    %v523 = vunpack.c.l.b16 %v486
    %v524 = vpack.c.b16 %v509, %v508
    %v525 = vpack.c.b16 %v511, %v510
    %v526 = vpack.c.b16 %v513, %v512
    %v527 = vpack.c.b16 %v515, %v514
    %v528 = vpack.c.b16 %v517, %v516
    %v529 = vpack.c.b16 %v519, %v518
    %v530 = vpack.c.b16 %v521, %v520
    %v531 = vpack.c.b16 %v523, %v522
    %540 = vmatprep.subr.bf16.mxu0 0
    %541 = vmatpush1.bf16.msra.mxu0 %v524
    %542 = vmatprep.subr.bf16.mxu0 0
    %543 = vmatpush1.bf16.msra.mxu0 %v525
    %544 = vmatprep.subr.bf16.mxu0 0
    %545 = vmatpush1.bf16.msra.mxu0 %v526
    %546 = vmatprep.subr.bf16.mxu0 0
    %547 = vmatpush1.bf16.msra.mxu0 %v527
    %548 = vmatprep.subr.bf16.mxu0 0
    %549 = vmatpush1.bf16.msra.mxu0 %v528
    %550 = vmatprep.subr.bf16.mxu0 0
    %551 = vmatpush1.bf16.msra.mxu0 %v529
    %552 = vmatprep.subr.bf16.mxu0 0
    %553 = vmatpush1.bf16.msra.mxu0 %v530
    %554 = vmatprep.subr.bf16.mxu0 0
    %555 = vmatpush1.bf16.msra.mxu0 %v531
    %556 = vmatprep.subr.bf16.mxu0 0
    %557 = vmatpush1.bf16.msra.mxu0 0
    %558 = vmatprep.subr.bf16.mxu0 0
    %559 = vmatpush1.bf16.msra.mxu0 0
    %560 = vmatprep.subr.bf16.mxu0 0
    %561 = vmatpush1.bf16.msra.mxu0 0
    %562 = vmatprep.subr.bf16.mxu0 0
    %563 = vmatpush1.bf16.msra.mxu0 0
    %564 = vmatprep.subr.bf16.mxu0 0
    %565 = vmatpush1.bf16.msra.mxu0 0
    %566 = vmatprep.subr.bf16.mxu0 0
    %567 = vmatpush1.bf16.msra.mxu0 0
    %568 = vmatprep.subr.bf16.mxu0 0
    %569 = vmatpush1.bf16.msra.mxu0 0
    %570 = vmatprep.subr.bf16.mxu0 0
    %571 = vmatpush1.bf16.msra.mxu0 0
    %572 = vmatprep.mubr.bf16.mxu0 0
    %573 = vmatmul.mubr.bf16.gmra.mrb[0].mxu0 %v470
    %v574 = vpop.f32.mrb[0].mxu0
    %v575 = vadd.f32 %v491, %v574
    %v576 = vpop.f32.mrb[0].mxu0
    %v577 = vpop.f32.mrb[0].mxu0
    %v578 = vadd.f32 %v491, %v577
    %v579 = vpop.f32.mrb[0].mxu0
    %580 = vdwg.mxu0
    %v581 = vmax.f32 %v575, 0.0
    %v582 = vmax.f32 %v578, 0.0
    %v583 = vpack.c.bf16 %v582, %v581
    %v584 = vld [vmem:[#allocation11] sm:$0xf]
    %v585 = vld [vmem:[#allocation11 + $0x4] sm:$0xf]
    %v586 = vld [vmem:[#allocation11 + $0x8] sm:$0xf]
    %v587 = vld [vmem:[#allocation11 + $0xc] sm:$0xf]
    %v588 = vld [vmem:[#allocation11 + $0x10] sm:$0xf]
    %v589 = vld [vmem:[#allocation11 + $0x14] sm:$0xf]
    %v590 = vld [vmem:[#allocation11 + $0x18] sm:$0xf]
    %v591 = vld [vmem:[#allocation11 + $0x1c] sm:$0xf]
    %v592 = vld [vmem:[#allocation11 + $0x20] sm:$0xf]
    %v593 = vld [vmem:[#allocation11 + $0x24] sm:$0xf]
    %v594 = vld [vmem:[#allocation11 + $0x28] sm:$0xf]
    %v595 = vld [vmem:[#allocation11 + $0x2c] sm:$0xf]
    %v596 = vld [vmem:[#allocation11 + $0x30] sm:$0xf]
    %v597 = vld [vmem:[#allocation11 + $0x34] sm:$0xf]
    %v598 = vld [vmem:[#allocation11 + $0x38] sm:$0xf]
    %v599 = vld [vmem:[#allocation11 + $0x3c] sm:$0xf]
    %v600 = vld [vmem:[%s7 + $0x4] sm:$0x1]
    %v601 = vlaneseq
    %v602 = vshrl.u32 %v601, 7
    %v603 = vsub.s32 0, %v602
    %v604 = vrot.slane %v600, %v603
    %v621 = vunpack.c.l.b16 %v584
    %v622 = vunpack.c.l.b16 %v585
    %v623 = vunpack.c.l.b16 %v586
    %v624 = vunpack.c.l.b16 %v587
    %v625 = vunpack.c.l.b16 %v588
    %v626 = vunpack.c.l.b16 %v589
    %v627 = vunpack.c.l.b16 %v590
    %v628 = vunpack.c.l.b16 %v591
    %v629 = vunpack.c.l.b16 %v592
    %v630 = vunpack.c.l.b16 %v593
    %v631 = vunpack.c.l.b16 %v594
    %v632 = vunpack.c.l.b16 %v595
    %v633 = vunpack.c.l.b16 %v596
    %v634 = vunpack.c.l.b16 %v597
    %v635 = vunpack.c.l.b16 %v598
    %v636 = vunpack.c.l.b16 %v599
    %v637 = vpack.c.b16 %v622, %v621
    %v638 = vpack.c.b16 %v624, %v623
    %v639 = vpack.c.b16 %v626, %v625
    %v640 = vpack.c.b16 %v628, %v627
    %v641 = vpack.c.b16 %v630, %v629
    %v642 = vpack.c.b16 %v632, %v631
    %v643 = vpack.c.b16 %v634, %v633
    %v644 = vpack.c.b16 %v636, %v635
    %653 = vmatprep.subr.bf16.mxu0 0
    %654 = vmatpush1.bf16.msra.mxu0 %v637
    %655 = vmatprep.subr.bf16.mxu0 0
    %656 = vmatpush1.bf16.msra.mxu0 %v638
    %657 = vmatprep.subr.bf16.mxu0 0
    %658 = vmatpush1.bf16.msra.mxu0 %v639
    %659 = vmatprep.subr.bf16.mxu0 0
    %660 = vmatpush1.bf16.msra.mxu0 %v640
    %661 = vmatprep.subr.bf16.mxu0 0
    %662 = vmatpush1.bf16.msra.mxu0 %v641
    %663 = vmatprep.subr.bf16.mxu0 0
    %664 = vmatpush1.bf16.msra.mxu0 %v642
    %665 = vmatprep.subr.bf16.mxu0 0
    %666 = vmatpush1.bf16.msra.mxu0 %v643
    %667 = vmatprep.subr.bf16.mxu0 0
    %668 = vmatpush1.bf16.msra.mxu0 %v644
    %669 = vmatprep.subr.bf16.mxu0 0
    %670 = vmatpush1.bf16.msra.mxu0 0
    %671 = vmatprep.subr.bf16.mxu0 0
    %672 = vmatpush1.bf16.msra.mxu0 0
    %673 = vmatprep.subr.bf16.mxu0 0
    %674 = vmatpush1.bf16.msra.mxu0 0
    %675 = vmatprep.subr.bf16.mxu0 0
    %676 = vmatpush1.bf16.msra.mxu0 0
    %677 = vmatprep.subr.bf16.mxu0 0
    %678 = vmatpush1.bf16.msra.mxu0 0
    %679 = vmatprep.subr.bf16.mxu0 0
    %680 = vmatpush1.bf16.msra.mxu0 0
    %681 = vmatprep.subr.bf16.mxu0 0
    %682 = vmatpush1.bf16.msra.mxu0 0
    %683 = vmatprep.subr.bf16.mxu0 0
    %684 = vmatpush1.bf16.msra.mxu0 0
    %685 = vmatprep.mubr.bf16.mxu0 0
    %686 = vmatmul.mubr.bf16.gmra.mrb[0].mxu0 %v583
    %v687 = vpop.f32.mrb[0].mxu0
    %v688 = vadd.f32 %v604, %v687
    %v689 = vpop.f32.mrb[0].mxu0
    %v690 = vpop.f32.mrb[0].mxu0
    %v691 = vadd.f32 %v604, %v690
    %v692 = vpop.f32.mrb[0].mxu0
    %693 = vdwg.mxu0
    %v694 = vmax.f32 %v688, 0.0
    %v695 = vmax.f32 %v691, 0.0
    %v696 = vpack.c.bf16 %v695, %v694
    %v697 = vld [vmem:[#allocation13] sm:$0xf]
    %v698 = vld [vmem:[#allocation13 + $0x4] sm:$0xf]
    %v699 = vld [vmem:[#allocation13 + $0x8] sm:$0xf]
    %v700 = vld [vmem:[#allocation13 + $0xc] sm:$0xf]
    %v701 = vld [vmem:[#allocation13 + $0x10] sm:$0xf]
    %v702 = vld [vmem:[#allocation13 + $0x14] sm:$0xf]
    %v703 = vld [vmem:[#allocation13 + $0x18] sm:$0xf]
    %v704 = vld [vmem:[#allocation13 + $0x1c] sm:$0xf]
    %v705 = vld [vmem:[#allocation13 + $0x20] sm:$0xf]
    %v706 = vld [vmem:[#allocation13 + $0x24] sm:$0xf]
    %v707 = vld [vmem:[#allocation13 + $0x28] sm:$0xf]
    %v708 = vld [vmem:[#allocation13 + $0x2c] sm:$0xf]
    %v709 = vld [vmem:[#allocation13 + $0x30] sm:$0xf]
    %v710 = vld [vmem:[#allocation13 + $0x34] sm:$0xf]
    %v711 = vld [vmem:[#allocation13 + $0x38] sm:$0xf]
    %v712 = vld [vmem:[#allocation13 + $0x3c] sm:$0xf]
    %v713 = vld [vmem:[%s7 + $0x5] sm:$0x1]
    %v714 = vlaneseq
    %v715 = vshrl.u32 %v714, 7
    %v716 = vsub.s32 0, %v715
    %v717 = vrot.slane %v713, %v716
    %v734 = vunpack.c.l.b16 %v697
    %v735 = vunpack.c.l.b16 %v698
    %v736 = vunpack.c.l.b16 %v699
    %v737 = vunpack.c.l.b16 %v700
    %v738 = vunpack.c.l.b16 %v701
    %v739 = vunpack.c.l.b16 %v702
    %v740 = vunpack.c.l.b16 %v703
    %v741 = vunpack.c.l.b16 %v704
    %v742 = vunpack.c.l.b16 %v705
    %v743 = vunpack.c.l.b16 %v706
    %v744 = vunpack.c.l.b16 %v707
    %v745 = vunpack.c.l.b16 %v708
    %v746 = vunpack.c.l.b16 %v709
    %v747 = vunpack.c.l.b16 %v710
    %v748 = vunpack.c.l.b16 %v711
    %v749 = vunpack.c.l.b16 %v712
    %v750 = vpack.c.b16 %v735, %v734
    %v751 = vpack.c.b16 %v737, %v736
    %v752 = vpack.c.b16 %v739, %v738
    %v753 = vpack.c.b16 %v741, %v740
    %v754 = vpack.c.b16 %v743, %v742
    %v755 = vpack.c.b16 %v745, %v744
    %v756 = vpack.c.b16 %v747, %v746
    %v757 = vpack.c.b16 %v749, %v748
    %766 = vmatprep.subr.bf16.mxu0 0
    %767 = vmatpush1.bf16.msra.mxu0 %v750
    %768 = vmatprep.subr.bf16.mxu0 0
    %769 = vmatpush1.bf16.msra.mxu0 %v751
    %770 = vmatprep.subr.bf16.mxu0 0
    %771 = vmatpush1.bf16.msra.mxu0 %v752
    %772 = vmatprep.subr.bf16.mxu0 0
    %773 = vmatpush1.bf16.msra.mxu0 %v753
    %774 = vmatprep.subr.bf16.mxu0 0
    %775 = vmatpush1.bf16.msra.mxu0 %v754
    %776 = vmatprep.subr.bf16.mxu0 0
    %777 = vmatpush1.bf16.msra.mxu0 %v755
    %778 = vmatprep.subr.bf16.mxu0 0
    %779 = vmatpush1.bf16.msra.mxu0 %v756
    %780 = vmatprep.subr.bf16.mxu0 0
    %781 = vmatpush1.bf16.msra.mxu0 %v757
    %782 = vmatprep.subr.bf16.mxu0 0
    %783 = vmatpush1.bf16.msra.mxu0 0
    %784 = vmatprep.subr.bf16.mxu0 0
    %785 = vmatpush1.bf16.msra.mxu0 0
    %786 = vmatprep.subr.bf16.mxu0 0
    %787 = vmatpush1.bf16.msra.mxu0 0
    %788 = vmatprep.subr.bf16.mxu0 0
    %789 = vmatpush1.bf16.msra.mxu0 0
    %790 = vmatprep.subr.bf16.mxu0 0
    %791 = vmatpush1.bf16.msra.mxu0 0
    %792 = vmatprep.subr.bf16.mxu0 0
    %793 = vmatpush1.bf16.msra.mxu0 0
    %794 = vmatprep.subr.bf16.mxu0 0
    %795 = vmatpush1.bf16.msra.mxu0 0
    %796 = vmatprep.subr.bf16.mxu0 0
    %797 = vmatpush1.bf16.msra.mxu0 0
    %798 = vmatprep.mubr.bf16.mxu0 0
    %799 = vmatmul.mubr.bf16.gmra.mrb[0].mxu0 %v696
    %v800 = vpop.f32.mrb[0].mxu0
    %v801 = vadd.f32 %v717, %v800
    %v802 = vpop.f32.mrb[0].mxu0
    %v803 = vpop.f32.mrb[0].mxu0
    %v804 = vadd.f32 %v717, %v803
    %v805 = vpop.f32.mrb[0].mxu0
    %806 = vdwg.mxu0
    %807 = vst [vmem:[#allocation14] sm:$0xff] %v801
    %808 = vst [vmem:[#allocation14 + $0x8] sm:$0xff] %v804
    // Predicated region
    $region62: #{tpu_custom_call.1} parent=1 // pred_check
      _
    $region63: #{tpu_custom_call.1} parent=1 // pred_check_branch
      %810 = sbr.rel (0) target = $region65
    $region64: #{tpu_custom_call.1} parent=1 // pred_region
      %s812 = ssub.s32 256, 256
      %813 = vsyncadd [#allocation4], %s812
      %s814 = sshll.u32 [#allocation14], 4
      %s815 = int_to_ptr.vmem [resolvable:$true] %s814
      %820 = dma.vmem_to_hbm [thread:$0]  %s815, 256, %s8, [#allocation4], 128, 128, 8
    $region65: #{tpu_custom_call.1} parent=1 // pred_fallthru
      _
    // Predicated region
    $region66: #{tpu_custom_call.1} parent=1 // pred_check
      _
    $region67: #{tpu_custom_call.1} parent=1 // pred_check_branch
      %822 = sbr.rel (0) target = $region69
    $region68: #{tpu_custom_call.1} parent=1 // pred_region
      %823 = dma.done [#allocation4], 256
    $region69: #{tpu_custom_call.1} parent=1 // pred_fallthru
      _
    %824 = vsyncpa [#allocation3], 1
    %825 = vsyncpa [#allocation6], 1
    %826 = vsyncpa [#allocation9], 1
    %827 = vsyncpa [#allocation12], 1
    %828 = vsyncpa [#allocation4], 1

// kernel: tpu_custom_call.1
$region0: #{tpu_custom_call.1}
  #allocation0 [shape = 'u32[]', space=smem, size = 0x4, offset = 0x4, fixed_abs, tag = 'smem constant byte address 0x4 - core index']
  #allocation1 [shape = 'u32[144,128]{1,0:T(1,128)}', space=vmem, size = 0x12000, scoped, tag = 'internal scratch']
  %s0 = inlined_call_operand.hbm [shape: bf16[16,128], index: 0, kind: input, shape index: {}]
  %s1 = inlined_call_operand.hbm [shape: bf16[128,128], index: 1, kind: input, shape index: {}]
  %s2 = inlined_call_operand.hbm [shape: bf16[128,128], index: 2, kind: input, shape index: {}]
  %s3 = inlined_call_operand.hbm [shape: bf16[128,128], index: 3, kind: input, shape index: {}]
  %s4 = inlined_call_operand.hbm [shape: bf16[128,128], index: 4, kind: input, shape index: {}]
  %s5 = inlined_call_operand.hbm [shape: bf16[128,128], index: 5, kind: input, shape index: {}]
  %s6 = inlined_call_operand.hbm [shape: bf16[128,128], index: 6, kind: input, shape index: {}]
  %s7 = inlined_call_operand.vmem [shape: f32[6,128], index: 7, kind: input, shape index: {}]
  %s8 = inlined_call_operand.hbm [shape: f32[16,128], index: 8, kind: output, shape index: {}]
  %s9 = sld [smem:[#allocation0]]
  $region70: #{tpu_custom_call.1} parent=0
    _
  %s11 = ssub.s32 1, %s9
  %s12 = scalar_select 0, %s11, %s9
  $region1: #{tpu_custom_call.1} parent=0
    #allocation2 [shape = 'u8[4096]{0}', space=vmem, size = 0x1000, scoped, tag = 'input window, operand 0, single buffered']
    #allocation3 [shape = 's32[1]{0}', space=sflag, size = 0x4, scoped, tag = 'scoped memory for tpu_custom_call.1']
    #allocation4 [shape = 's32[1]{0}', space=sflag, size = 0x4, scoped, tag = 'scoped memory for tpu_custom_call.1']
    #allocation5 [shape = 'u8[32768]{0}', space=vmem, size = 0x8000, scoped, tag = 'input window, operand 1, single buffered']
    #allocation6 [shape = 's32[1]{0}', space=sflag, size = 0x4, scoped, tag = 'scoped memory for tpu_custom_call.1']
    #allocation7 [shape = 'u8[32768]{0}', space=vmem, size = 0x8000, scoped, tag = 'input window, operand 2, single buffered']
    #allocation8 [shape = 'u8[32768]{0}', space=vmem, size = 0x8000, scoped, tag = 'input window, operand 3, single buffered']
    #allocation9 [shape = 's32[1]{0}', space=sflag, size = 0x4, scoped, tag = 'scoped memory for tpu_custom_call.1']
    #allocation10 [shape = 'u8[32768]{0}', space=vmem, size = 0x8000, scoped, tag = 'input window, operand 4, single buffered']
    #allocation11 [shape = 'u8[32768]{0}', space=vmem, size = 0x8000, scoped, tag = 'input window, operand 5, single buffered']
    #allocation12 [shape = 's32[1]{0}', space=sflag, size = 0x4, scoped, tag = 'scoped memory for tpu_custom_call.1']
    #allocation13 [shape = 'u8[32768]{0}', space=vmem, size = 0x8000, scoped, tag = 'input window, operand 6, single buffered']
    #allocation14 [shape = 'u8[8192]{0}', space=vmem, size = 0x2000, scoped, tag = 'output window, operand 0, single buffered']
    %13 = vsyncpa [#allocation3], 0
    %14 = vsyncpa [#allocation6], 0
    %15 = vsyncpa [#allocation9], 0
    %16 = vsyncpa [#allocation12], 0
    %17 = vsyncpa [#allocation4], 0
    // Predicated region
    $region2: #{tpu_custom_call.1} parent=1 // pred_check
      _
    $region3: #{tpu_custom_call.1} parent=1 // pred_check_branch
      %19 = sbr.rel (0) target = $region5
    $region4: #{tpu_custom_call.1} parent=1 // pred_region
      %s21 = ssub.s32 128, 128
      %22 = vsyncadd [#allocation3], %s21
      %s23 = sshll.u32 [#allocation2], 4
      %s24 = int_to_ptr.vmem [resolvable:$true] %s23
      %29 = dma.hbm_to_vmem [thread:$0]  %s0, 128, %s24, [#allocation3], 64, 64, 4
    $region5: #{tpu_custom_call.1} parent=1 // pred_fallthru
      _
    // Predicated region
    $region6: #{tpu_custom_call.1} parent=1 // pred_check
      _
    $region7: #{tpu_custom_call.1} parent=1 // pred_check_branch
      %31 = sbr.rel (0) target = $region9
    $region8: #{tpu_custom_call.1} parent=1 // pred_region
      %s33 = ssub.s32 1024, 1024
      %34 = vsyncadd [#allocation6], %s33
      %s35 = sshll.u32 [#allocation5], 4
      %s36 = int_to_ptr.vmem [resolvable:$true] %s35
      %41 = dma.hbm_to_vmem [thread:$0]  %s1, 1024, %s36, [#allocation6], 64, 64, 4
    $region9: #{tpu_custom_call.1} parent=1 // pred_fallthru
      _
    // Predicated region
    $region10: #{tpu_custom_call.1} parent=1 // pred_check
      _
    $region11: #{tpu_custom_call.1} parent=1 // pred_check_branch
      %43 = sbr.rel (0) target = $region13
    $region12: #{tpu_custom_call.1} parent=1 // pred_region
      %s45 = ssub.s32 1024, 1024
      %46 = vsyncadd [#allocation6], %s45
      %s47 = sshll.u32 [#allocation7], 4
      %s48 = int_to_ptr.vmem [resolvable:$true] %s47
      %53 = dma.hbm_to_vmem [thread:$0]  %s2, 1024, %s48, [#allocation6], 64, 64, 4
    $region13: #{tpu_custom_call.1} parent=1 // pred_fallthru
      _
    // Predicated region
    $region14: #{tpu_custom_call.1} parent=1 // pred_check
      _
    $region15: #{tpu_custom_call.1} parent=1 // pred_check_branch
      %55 = sbr.rel (0) target = $region17
    $region16: #{tpu_custom_call.1} parent=1 // pred_region
      %s57 = ssub.s32 1024, 1024
      %58 = vsyncadd [#allocation9], %s57
      %s59 = sshll.u32 [#allocation8], 4
      %s60 = int_to_ptr.vmem [resolvable:$true] %s59
      %65 = dma.hbm_to_vmem [thread:$0]  %s3, 1024, %s60, [#allocation9], 64, 64, 4
    $region17: #{tpu_custom_call.1} parent=1 // pred_fallthru
      _
    // Predicated region
    $region18: #{tpu_custom_call.1} parent=1 // pred_check
      _
    $region19: #{tpu_custom_call.1} parent=1 // pred_check_branch
      %67 = sbr.rel (0) target = $region21
    $region20: #{tpu_custom_call.1} parent=1 // pred_region
      %s69 = ssub.s32 1024, 1024
      %70 = vsyncadd [#allocation9], %s69
      %s71 = sshll.u32 [#allocation10], 4
      %s72 = int_to_ptr.vmem [resolvable:$true] %s71
      %77 = dma.hbm_to_vmem [thread:$0]  %s4, 1024, %s72, [#allocation9], 64, 64, 4
    $region21: #{tpu_custom_call.1} parent=1 // pred_fallthru
      _
    // Predicated region
    $region22: #{tpu_custom_call.1} parent=1 // pred_check
      _
    $region23: #{tpu_custom_call.1} parent=1 // pred_check_branch
      %79 = sbr.rel (0) target = $region25
    $region24: #{tpu_custom_call.1} parent=1 // pred_region
      %s81 = ssub.s32 1024, 1024
      %82 = vsyncadd [#allocation12], %s81
      %s83 = sshll.u32 [#allocation11], 4
      %s84 = int_to_ptr.vmem [resolvable:$true] %s83
      %89 = dma.hbm_to_vmem [thread:$0]  %s5, 1024, %s84, [#allocation12], 64, 64, 4
    $region25: #{tpu_custom_call.1} parent=1 // pred_fallthru
      _
    // Predicated region
    $region26: #{tpu_custom_call.1} parent=1 // pred_check
      _
    $region27: #{tpu_custom_call.1} parent=1 // pred_check_branch
      %91 = sbr.rel (0) target = $region29
    $region28: #{tpu_custom_call.1} parent=1 // pred_region
      %s93 = ssub.s32 1024, 1024
      %94 = vsyncadd [#allocation12], %s93
      %s95 = sshll.u32 [#allocation13], 4
      %s96 = int_to_ptr.vmem [resolvable:$true] %s95
      %101 = dma.hbm_to_vmem [thread:$0]  %s6, 1024, %s96, [#allocation12], 64, 64, 4
    $region29: #{tpu_custom_call.1} parent=1 // pred_fallthru
      _
    // Predicated region
    $region30: #{tpu_custom_call.1} parent=1 // pred_check
      _
    $region31: #{tpu_custom_call.1} parent=1 // pred_check_branch
      %103 = sbr.rel (0) target = $region33
    $region32: #{tpu_custom_call.1} parent=1 // pred_region
      _
    $region33: #{tpu_custom_call.1} parent=1 // pred_fallthru
      _
    // Predicated region
    $region34: #{tpu_custom_call.1} parent=1 // pred_check
      _
    $region35: #{tpu_custom_call.1} parent=1 // pred_check_branch
      %105 = sbr.rel (0) target = $region37
    $region36: #{tpu_custom_call.1} parent=1 // pred_region
      %106 = dma.done [#allocation3], 128
    $region37: #{tpu_custom_call.1} parent=1 // pred_fallthru
      _
    // Predicated region
    $region38: #{tpu_custom_call.1} parent=1 // pred_check
      _
    $region39: #{tpu_custom_call.1} parent=1 // pred_check_branch
      %108 = sbr.rel (0) target = $region41
    $region40: #{tpu_custom_call.1} parent=1 // pred_region
      %109 = dma.done [#allocation6], 1024
    $region41: #{tpu_custom_call.1} parent=1 // pred_fallthru
      _
    // Predicated region
    $region42: #{tpu_custom_call.1} parent=1 // pred_check
      _
    $region43: #{tpu_custom_call.1} parent=1 // pred_check_branch
      %111 = sbr.rel (0) target = $region45
    $region44: #{tpu_custom_call.1} parent=1 // pred_region
      %112 = dma.done [#allocation6], 1024
    $region45: #{tpu_custom_call.1} parent=1 // pred_fallthru
      _
    // Predicated region
    $region46: #{tpu_custom_call.1} parent=1 // pred_check
      _
    $region47: #{tpu_custom_call.1} parent=1 // pred_check_branch
      %114 = sbr.rel (0) target = $region49
    $region48: #{tpu_custom_call.1} parent=1 // pred_region
      %115 = dma.done [#allocation9], 1024
    $region49: #{tpu_custom_call.1} parent=1 // pred_fallthru
      _
    // Predicated region
    $region50: #{tpu_custom_call.1} parent=1 // pred_check
      _
    $region51: #{tpu_custom_call.1} parent=1 // pred_check_branch
      %117 = sbr.rel (0) target = $region53
    $region52: #{tpu_custom_call.1} parent=1 // pred_region
      %118 = dma.done [#allocation9], 1024
    $region53: #{tpu_custom_call.1} parent=1 // pred_fallthru
      _
    // Predicated region
    $region54: #{tpu_custom_call.1} parent=1 // pred_check
      _
    $region55: #{tpu_custom_call.1} parent=1 // pred_check_branch
      %120 = sbr.rel (0) target = $region57
    $region56: #{tpu_custom_call.1} parent=1 // pred_region
      %121 = dma.done [#allocation12], 1024
    $region57: #{tpu_custom_call.1} parent=1 // pred_fallthru
      _
    // Predicated region
    $region58: #{tpu_custom_call.1} parent=1 // pred_check
      _
    $region59: #{tpu_custom_call.1} parent=1 // pred_check_branch
      %123 = sbr.rel (0) target = $region61
    $region60: #{tpu_custom_call.1} parent=1 // pred_region
      %124 = dma.done [#allocation12], 1024
    $region61: #{tpu_custom_call.1} parent=1 // pred_fallthru
      _
    %v126 = vld [vmem:[#allocation2] sm:$0xf]
    %v127 = vld [vmem:[#allocation2 + $0x4] sm:$0xf]
    %v128 = vld [vmem:[#allocation5] sm:$0xf]
    %v129 = vld [vmem:[#allocation5 + $0x4] sm:$0xf]
    %v130 = vld [vmem:[#allocation5 + $0x8] sm:$0xf]
    %v131 = vld [vmem:[#allocation5 + $0xc] sm:$0xf]
    %v132 = vld [vmem:[#allocation5 + $0x10] sm:$0xf]
    %v133 = vld [vmem:[#allocation5 + $0x14] sm:$0xf]
    %v134 = vld [vmem:[#allocation5 + $0x18] sm:$0xf]
    %v135 = vld [vmem:[#allocation5 + $0x1c] sm:$0xf]
    %v136 = vld [vmem:[#allocation5 + $0x20] sm:$0xf]
    %v137 = vld [vmem:[#allocation5 + $0x24] sm:$0xf]
    %v138 = vld [vmem:[#allocation5 + $0x28] sm:$0xf]
    %v139 = vld [vmem:[#allocation5 + $0x2c] sm:$0xf]
    %v140 = vld [vmem:[#allocation5 + $0x30] sm:$0xf]
    %v141 = vld [vmem:[#allocation5 + $0x34] sm:$0xf]
    %v142 = vld [vmem:[#allocation5 + $0x38] sm:$0xf]
    %v143 = vld [vmem:[#allocation5 + $0x3c] sm:$0xf]
    %v144 = vld [vmem:[%s7] sm:$0x1]
    %v145 = vlaneseq
    %v146 = vshrl.u32 %v145, 7
    %v147 = vsub.s32 0, %v146
    %v148 = vrot.slane %v144, %v147
    %v151 = vunpack.c.l.b16 %v126
    %v152 = vunpack.c.l.b16 %v127
    %v153 = vpack.c.b16 %v152, %v151
    %v171 = vunpack.c.l.b16 %v128
    %v172 = vunpack.c.l.b16 %v129
    %v173 = vunpack.c.l.b16 %v130
    %v174 = vunpack.c.l.b16 %v131
    %v175 = vunpack.c.l.b16 %v132
    %v176 = vunpack.c.l.b16 %v133
    %v177 = vunpack.c.l.b16 %v134
    %v178 = vunpack.c.l.b16 %v135
    %v179 = vunpack.c.l.b16 %v136
    %v180 = vunpack.c.l.b16 %v137
    %v181 = vunpack.c.l.b16 %v138
    %v182 = vunpack.c.l.b16 %v139
    %v183 = vunpack.c.l.b16 %v140
    %v184 = vunpack.c.l.b16 %v141
    %v185 = vunpack.c.l.b16 %v142
    %v186 = vunpack.c.l.b16 %v143
    %v187 = vpack.c.b16 %v172, %v171
    %v188 = vpack.c.b16 %v174, %v173
    %v189 = vpack.c.b16 %v176, %v175
    %v190 = vpack.c.b16 %v178, %v177
    %v191 = vpack.c.b16 %v180, %v179
    %v192 = vpack.c.b16 %v182, %v181
    %v193 = vpack.c.b16 %v184, %v183
    %v194 = vpack.c.b16 %v186, %v185
    %203 = vmatprep.subr.bf16.mxu0 0
    %204 = vmatpush1.bf16.msra.mxu0 %v187
    %205 = vmatprep.subr.bf16.mxu0 0
    %206 = vmatpush1.bf16.msra.mxu0 %v188
    %207 = vmatprep.subr.bf16.mxu0 0
    %208 = vmatpush1.bf16.msra.mxu0 %v189
    %209 = vmatprep.subr.bf16.mxu0 0
    %210 = vmatpush1.bf16.msra.mxu0 %v190
    %211 = vmatprep.subr.bf16.mxu0 0
    %212 = vmatpush1.bf16.msra.mxu0 %v191
    %213 = vmatprep.subr.bf16.mxu0 0
    %214 = vmatpush1.bf16.msra.mxu0 %v192
    %215 = vmatprep.subr.bf16.mxu0 0
    %216 = vmatpush1.bf16.msra.mxu0 %v193
    %217 = vmatprep.subr.bf16.mxu0 0
    %218 = vmatpush1.bf16.msra.mxu0 %v194
    %219 = vmatprep.subr.bf16.mxu0 0
    %220 = vmatpush1.bf16.msra.mxu0 0
    %221 = vmatprep.subr.bf16.mxu0 0
    %222 = vmatpush1.bf16.msra.mxu0 0
    %223 = vmatprep.subr.bf16.mxu0 0
    %224 = vmatpush1.bf16.msra.mxu0 0
    %225 = vmatprep.subr.bf16.mxu0 0
    %226 = vmatpush1.bf16.msra.mxu0 0
    %227 = vmatprep.subr.bf16.mxu0 0
    %228 = vmatpush1.bf16.msra.mxu0 0
    %229 = vmatprep.subr.bf16.mxu0 0
    %230 = vmatpush1.bf16.msra.mxu0 0
    %231 = vmatprep.subr.bf16.mxu0 0
    %232 = vmatpush1.bf16.msra.mxu0 0
    %233 = vmatprep.subr.bf16.mxu0 0
    %234 = vmatpush1.bf16.msra.mxu0 0
    %235 = vmatprep.mubr.bf16.mxu0 0
    %236 = vmatmul.mubr.bf16.gmra.mrb[0].mxu0 %v153
    %v237 = vpop.f32.mrb[0].mxu0
    %v238 = vadd.f32 %v148, %v237
    %v239 = vpop.f32.mrb[0].mxu0
    %v240 = vpop.f32.mrb[0].mxu0
    %v241 = vadd.f32 %v148, %v240
    %v242 = vpop.f32.mrb[0].mxu0
    %243 = vdwg.mxu0
    %v244 = vmax.f32 %v238, 0.0
    %v245 = vmax.f32 %v241, 0.0
    %v246 = vpack.c.bf16 %v245, %v244
    %v247 = vld [vmem:[#allocation7] sm:$0xf]
    %v248 = vld [vmem:[#allocation7 + $0x4] sm:$0xf]
    %v249 = vld [vmem:[#allocation7 + $0x8] sm:$0xf]
    %v250 = vld [vmem:[#allocation7 + $0xc] sm:$0xf]
    %v251 = vld [vmem:[#allocation7 + $0x10] sm:$0xf]
    %v252 = vld [vmem:[#allocation7 + $0x14] sm:$0xf]
    %v253 = vld [vmem:[#allocation7 + $0x18] sm:$0xf]
    %v254 = vld [vmem:[#allocation7 + $0x1c] sm:$0xf]
    %v255 = vld [vmem:[#allocation7 + $0x20] sm:$0xf]
    %v256 = vld [vmem:[#allocation7 + $0x24] sm:$0xf]
    %v257 = vld [vmem:[#allocation7 + $0x28] sm:$0xf]
    %v258 = vld [vmem:[#allocation7 + $0x2c] sm:$0xf]
    %v259 = vld [vmem:[#allocation7 + $0x30] sm:$0xf]
    %v260 = vld [vmem:[#allocation7 + $0x34] sm:$0xf]
    %v261 = vld [vmem:[#allocation7 + $0x38] sm:$0xf]
    %v262 = vld [vmem:[#allocation7 + $0x3c] sm:$0xf]
    %v263 = vld [vmem:[%s7 + $0x1] sm:$0x1]
    %v264 = vlaneseq
    %v265 = vshrl.u32 %v264, 7
    %v266 = vsub.s32 0, %v265
    %v267 = vrot.slane %v263, %v266
    %v284 = vunpack.c.l.b16 %v247
    %v285 = vunpack.c.l.b16 %v248
    %v286 = vunpack.c.l.b16 %v249
    %v287 = vunpack.c.l.b16 %v250
    %v288 = vunpack.c.l.b16 %v251
    %v289 = vunpack.c.l.b16 %v252
    %v290 = vunpack.c.l.b16 %v253
    %v291 = vunpack.c.l.b16 %v254
    %v292 = vunpack.c.l.b16 %v255
    %v293 = vunpack.c.l.b16 %v256
    %v294 = vunpack.c.l.b16 %v257
    %v295 = vunpack.c.l.b16 %v258
    %v296 = vunpack.c.l.b16 %v259
    %v297 = vunpack.c.l.b16 %v260
    %v298 = vunpack.c.l.b16 %v261
    %v299 = vunpack.c.l.b16 %v262
    %v300 = vpack.c.b16 %v285, %v284
    %v301 = vpack.c.b16 %v287, %v286
    %v302 = vpack.c.b16 %v289, %v288
    %v303 = vpack.c.b16 %v291, %v290
    %v304 = vpack.c.b16 %v293, %v292
    %v305 = vpack.c.b16 %v295, %v294
    %v306 = vpack.c.b16 %v297, %v296
    %v307 = vpack.c.b16 %v299, %v298
    %316 = vmatprep.subr.bf16.mxu0 0
    %317 = vmatpush1.bf16.msra.mxu0 %v300
    %318 = vmatprep.subr.bf16.mxu0 0
    %319 = vmatpush1.bf16.msra.mxu0 %v301
    %320 = vmatprep.subr.bf16.mxu0 0
    %321 = vmatpush1.bf16.msra.mxu0 %v302
    %322 = vmatprep.subr.bf16.mxu0 0
    %323 = vmatpush1.bf16.msra.mxu0 %v303
    %324 = vmatprep.subr.bf16.mxu0 0
    %325 = vmatpush1.bf16.msra.mxu0 %v304
    %326 = vmatprep.subr.bf16.mxu0 0
    %327 = vmatpush1.bf16.msra.mxu0 %v305
    %328 = vmatprep.subr.bf16.mxu0 0
    %329 = vmatpush1.bf16.msra.mxu0 %v306
    %330 = vmatprep.subr.bf16.mxu0 0
    %331 = vmatpush1.bf16.msra.mxu0 %v307
    %332 = vmatprep.subr.bf16.mxu0 0
    %333 = vmatpush1.bf16.msra.mxu0 0
    %334 = vmatprep.subr.bf16.mxu0 0
    %335 = vmatpush1.bf16.msra.mxu0 0
    %336 = vmatprep.subr.bf16.mxu0 0
    %337 = vmatpush1.bf16.msra.mxu0 0
    %338 = vmatprep.subr.bf16.mxu0 0
    %339 = vmatpush1.bf16.msra.mxu0 0
    %340 = vmatprep.subr.bf16.mxu0 0
    %341 = vmatpush1.bf16.msra.mxu0 0
    %342 = vmatprep.subr.bf16.mxu0 0
    %343 = vmatpush1.bf16.msra.mxu0 0
    %344 = vmatprep.subr.bf16.mxu0 0
    %345 = vmatpush1.bf16.msra.mxu0 0
    %346 = vmatprep.subr.bf16.mxu0 0
    %347 = vmatpush1.bf16.msra.mxu0 0
    %348 = vmatprep.mubr.bf16.mxu0 0
    %349 = vmatmul.mubr.bf16.gmra.mrb[0].mxu0 %v246
    %v350 = vpop.f32.mrb[0].mxu0
    %v351 = vadd.f32 %v267, %v350
    %v352 = vpop.f32.mrb[0].mxu0
    %v353 = vpop.f32.mrb[0].mxu0
    %v354 = vadd.f32 %v267, %v353
    %v355 = vpop.f32.mrb[0].mxu0
    %356 = vdwg.mxu0
    %v357 = vmax.f32 %v351, 0.0
    %v358 = vmax.f32 %v354, 0.0
    %v359 = vpack.c.bf16 %v358, %v357
    %v360 = vld [vmem:[#allocation8] sm:$0xf]
    %v361 = vld [vmem:[#allocation8 + $0x4] sm:$0xf]
    %v362 = vld [vmem:[#allocation8 + $0x8] sm:$0xf]
    %v363 = vld [vmem:[#allocation8 + $0xc] sm:$0xf]
    %v364 = vld [vmem:[#allocation8 + $0x10] sm:$0xf]
    %v365 = vld [vmem:[#allocation8 + $0x14] sm:$0xf]
    %v366 = vld [vmem:[#allocation8 + $0x18] sm:$0xf]
    %v367 = vld [vmem:[#allocation8 + $0x1c] sm:$0xf]
    %v368 = vld [vmem:[#allocation8 + $0x20] sm:$0xf]
    %v369 = vld [vmem:[#allocation8 + $0x24] sm:$0xf]
    %v370 = vld [vmem:[#allocation8 + $0x28] sm:$0xf]
    %v371 = vld [vmem:[#allocation8 + $0x2c] sm:$0xf]
    %v372 = vld [vmem:[#allocation8 + $0x30] sm:$0xf]
    %v373 = vld [vmem:[#allocation8 + $0x34] sm:$0xf]
    %v374 = vld [vmem:[#allocation8 + $0x38] sm:$0xf]
    %v375 = vld [vmem:[#allocation8 + $0x3c] sm:$0xf]
    %v376 = vld [vmem:[%s7 + $0x2] sm:$0x1]
    %v377 = vlaneseq
    %v378 = vshrl.u32 %v377, 7
    %v379 = vsub.s32 0, %v378
    %v380 = vrot.slane %v376, %v379
    %v397 = vunpack.c.l.b16 %v360
    %v398 = vunpack.c.l.b16 %v361
    %v399 = vunpack.c.l.b16 %v362
    %v400 = vunpack.c.l.b16 %v363
    %v401 = vunpack.c.l.b16 %v364
    %v402 = vunpack.c.l.b16 %v365
    %v403 = vunpack.c.l.b16 %v366
    %v404 = vunpack.c.l.b16 %v367
    %v405 = vunpack.c.l.b16 %v368
    %v406 = vunpack.c.l.b16 %v369
    %v407 = vunpack.c.l.b16 %v370
    %v408 = vunpack.c.l.b16 %v371
    %v409 = vunpack.c.l.b16 %v372
    %v410 = vunpack.c.l.b16 %v373
    %v411 = vunpack.c.l.b16 %v374
    %v412 = vunpack.c.l.b16 %v375
    %v413 = vpack.c.b16 %v398, %v397
    %v414 = vpack.c.b16 %v400, %v399
    %v415 = vpack.c.b16 %v402, %v401
    %v416 = vpack.c.b16 %v404, %v403
    %v417 = vpack.c.b16 %v406, %v405
    %v418 = vpack.c.b16 %v408, %v407
    %v419 = vpack.c.b16 %v410, %v409
    %v420 = vpack.c.b16 %v412, %v411
    %429 = vmatprep.subr.bf16.mxu0 0
    %430 = vmatpush1.bf16.msra.mxu0 %v413
    %431 = vmatprep.subr.bf16.mxu0 0
    %432 = vmatpush1.bf16.msra.mxu0 %v414
    %433 = vmatprep.subr.bf16.mxu0 0
    %434 = vmatpush1.bf16.msra.mxu0 %v415
    %435 = vmatprep.subr.bf16.mxu0 0
    %436 = vmatpush1.bf16.msra.mxu0 %v416
    %437 = vmatprep.subr.bf16.mxu0 0
    %438 = vmatpush1.bf16.msra.mxu0 %v417
    %439 = vmatprep.subr.bf16.mxu0 0
    %440 = vmatpush1.bf16.msra.mxu0 %v418
    %441 = vmatprep.subr.bf16.mxu0 0
    %442 = vmatpush1.bf16.msra.mxu0 %v419
    %443 = vmatprep.subr.bf16.mxu0 0
    %444 = vmatpush1.bf16.msra.mxu0 %v420
    %445 = vmatprep.subr.bf16.mxu0 0
    %446 = vmatpush1.bf16.msra.mxu0 0
    %447 = vmatprep.subr.bf16.mxu0 0
    %448 = vmatpush1.bf16.msra.mxu0 0
    %449 = vmatprep.subr.bf16.mxu0 0
    %450 = vmatpush1.bf16.msra.mxu0 0
    %451 = vmatprep.subr.bf16.mxu0 0
    %452 = vmatpush1.bf16.msra.mxu0 0
    %453 = vmatprep.subr.bf16.mxu0 0
    %454 = vmatpush1.bf16.msra.mxu0 0
    %455 = vmatprep.subr.bf16.mxu0 0
    %456 = vmatpush1.bf16.msra.mxu0 0
    %457 = vmatprep.subr.bf16.mxu0 0
    %458 = vmatpush1.bf16.msra.mxu0 0
    %459 = vmatprep.subr.bf16.mxu0 0
    %460 = vmatpush1.bf16.msra.mxu0 0
    %461 = vmatprep.mubr.bf16.mxu0 0
    %462 = vmatmul.mubr.bf16.gmra.mrb[0].mxu0 %v359
    %v463 = vpop.f32.mrb[0].mxu0
    %v464 = vadd.f32 %v380, %v463
    %v465 = vpop.f32.mrb[0].mxu0
    %v466 = vpop.f32.mrb[0].mxu0
    %v467 = vadd.f32 %v380, %v466
    %v468 = vpop.f32.mrb[0].mxu0
    %469 = vdwg.mxu0
    %v470 = vpack.c.bf16 %v467, %v464
    %v471 = vld [vmem:[#allocation10] sm:$0xf]
    %v472 = vld [vmem:[#allocation10 + $0x4] sm:$0xf]
    %v473 = vld [vmem:[#allocation10 + $0x8] sm:$0xf]
    %v474 = vld [vmem:[#allocation10 + $0xc] sm:$0xf]
    %v475 = vld [vmem:[#allocation10 + $0x10] sm:$0xf]
    %v476 = vld [vmem:[#allocation10 + $0x14] sm:$0xf]
    %v477 = vld [vmem:[#allocation10 + $0x18] sm:$0xf]
    %v478 = vld [vmem:[#allocation10 + $0x1c] sm:$0xf]
    %v479 = vld [vmem:[#allocation10 + $0x20] sm:$0xf]
    %v480 = vld [vmem:[#allocation10 + $0x24] sm:$0xf]
    %v481 = vld [vmem:[#allocation10 + $0x28] sm:$0xf]
    %v482 = vld [vmem:[#allocation10 + $0x2c] sm:$0xf]
    %v483 = vld [vmem:[#allocation10 + $0x30] sm:$0xf]
    %v484 = vld [vmem:[#allocation10 + $0x34] sm:$0xf]
    %v485 = vld [vmem:[#allocation10 + $0x38] sm:$0xf]
    %v486 = vld [vmem:[#allocation10 + $0x3c] sm:$0xf]
    %v487 = vld [vmem:[%s7 + $0x3] sm:$0x1]
    %v488 = vlaneseq
    %v489 = vshrl.u32 %v488, 7
    %v490 = vsub.s32 0, %v489
    %v491 = vrot.slane %v487, %v490
    %v508 = vunpack.c.l.b16 %v471
    %v509 = vunpack.c.l.b16 %v472
    %v510 = vunpack.c.l.b16 %v473
    %v511 = vunpack.c.l.b16 %v474
    %v512 = vunpack.c.l.b16 %v475
    %v513 = vunpack.c.l.b16 %v476
    %v514 = vunpack.c.l.b16 %v477
    %v515 = vunpack.c.l.b16 %v478
    %v516 = vunpack.c.l.b16 %v479
    %v517 = vunpack.c.l.b16 %v480
    %v518 = vunpack.c.l.b16 %v481
    %v519 = vunpack.c.l.b16 %v482
    %v520 = vunpack.c.l.b16 %v483
    %v521 = vunpack.c.l.b16 %v484
    %v522 = vunpack.c.l.b16 %v485
    %v523 = vunpack.c.l.b16 %v486
    %v524 = vpack.c.b16 %v509, %v508
    %v525 = vpack.c.b16 %v511, %v510
    %v526 = vpack.c.b16 %v513, %v512
    %v527 = vpack.c.b16 %v515, %v514
    %v528 = vpack.c.b16 %v517, %v516
    %v529 = vpack.c.b16 %v519, %v518
    %v530 = vpack.c.b16 %v521, %v520
    %v531 = vpack.c.b16 %v523, %v522
    %540 = vmatprep.subr.bf16.mxu0 0
    %541 = vmatpush1.bf16.msra.mxu0 %v524
    %542 = vmatprep.subr.bf16.mxu0 0
    %543 = vmatpush1.bf16.msra.mxu0 %v525
    %544 = vmatprep.subr.bf16.mxu0 0
    %545 = vmatpush1.bf16.msra.mxu0 %v526
    %546 = vmatprep.subr.bf16.mxu0 0
    %547 = vmatpush1.bf16.msra.mxu0 %v527
    %548 = vmatprep.subr.bf16.mxu0 0
    %549 = vmatpush1.bf16.msra.mxu0 %v528
    %550 = vmatprep.subr.bf16.mxu0 0
    %551 = vmatpush1.bf16.msra.mxu0 %v529
    %552 = vmatprep.subr.bf16.mxu0 0
    %553 = vmatpush1.bf16.msra.mxu0 %v530
    %554 = vmatprep.subr.bf16.mxu0 0
    %555 = vmatpush1.bf16.msra.mxu0 %v531
    %556 = vmatprep.subr.bf16.mxu0 0
    %557 = vmatpush1.bf16.msra.mxu0 0
    %558 = vmatprep.subr.bf16.mxu0 0
    %559 = vmatpush1.bf16.msra.mxu0 0
    %560 = vmatprep.subr.bf16.mxu0 0
    %561 = vmatpush1.bf16.msra.mxu0 0
    %562 = vmatprep.subr.bf16.mxu0 0
    %563 = vmatpush1.bf16.msra.mxu0 0
    %564 = vmatprep.subr.bf16.mxu0 0
    %565 = vmatpush1.bf16.msra.mxu0 0
    %566 = vmatprep.subr.bf16.mxu0 0
    %567 = vmatpush1.bf16.msra.mxu0 0
    %568 = vmatprep.subr.bf16.mxu0 0
    %569 = vmatpush1.bf16.msra.mxu0 0
    %570 = vmatprep.subr.bf16.mxu0 0
    %571 = vmatpush1.bf16.msra.mxu0 0
    %572 = vmatprep.mubr.bf16.mxu0 0
    %573 = vmatmul.mubr.bf16.gmra.mrb[0].mxu0 %v470
    %v574 = vpop.f32.mrb[0].mxu0
    %v575 = vadd.f32 %v491, %v574
    %v576 = vpop.f32.mrb[0].mxu0
    %v577 = vpop.f32.mrb[0].mxu0
    %v578 = vadd.f32 %v491, %v577
    %v579 = vpop.f32.mrb[0].mxu0
    %580 = vdwg.mxu0
    %v581 = vmax.f32 %v575, 0.0
    %v582 = vmax.f32 %v578, 0.0
    %v583 = vpack.c.bf16 %v582, %v581
    %v584 = vld [vmem:[#allocation11] sm:$0xf]
    %v585 = vld [vmem:[#allocation11 + $0x4] sm:$0xf]
    %v586 = vld [vmem:[#allocation11 + $0x8] sm:$0xf]
    %v587 = vld [vmem:[#allocation11 + $0xc] sm:$0xf]
    %v588 = vld [vmem:[#allocation11 + $0x10] sm:$0xf]
    %v589 = vld [vmem:[#allocation11 + $0x14] sm:$0xf]
    %v590 = vld [vmem:[#allocation11 + $0x18] sm:$0xf]
    %v591 = vld [vmem:[#allocation11 + $0x1c] sm:$0xf]
    %v592 = vld [vmem:[#allocation11 + $0x20] sm:$0xf]
    %v593 = vld [vmem:[#allocation11 + $0x24] sm:$0xf]
    %v594 = vld [vmem:[#allocation11 + $0x28] sm:$0xf]
    %v595 = vld [vmem:[#allocation11 + $0x2c] sm:$0xf]
    %v596 = vld [vmem:[#allocation11 + $0x30] sm:$0xf]
    %v597 = vld [vmem:[#allocation11 + $0x34] sm:$0xf]
    %v598 = vld [vmem:[#allocation11 + $0x38] sm:$0xf]
    %v599 = vld [vmem:[#allocation11 + $0x3c] sm:$0xf]
    %v600 = vld [vmem:[%s7 + $0x4] sm:$0x1]
    %v601 = vlaneseq
    %v602 = vshrl.u32 %v601, 7
    %v603 = vsub.s32 0, %v602
    %v604 = vrot.slane %v600, %v603
    %v621 = vunpack.c.l.b16 %v584
    %v622 = vunpack.c.l.b16 %v585
    %v623 = vunpack.c.l.b16 %v586
    %v624 = vunpack.c.l.b16 %v587
    %v625 = vunpack.c.l.b16 %v588
    %v626 = vunpack.c.l.b16 %v589
    %v627 = vunpack.c.l.b16 %v590
    %v628 = vunpack.c.l.b16 %v591
    %v629 = vunpack.c.l.b16 %v592
    %v630 = vunpack.c.l.b16 %v593
    %v631 = vunpack.c.l.b16 %v594
    %v632 = vunpack.c.l.b16 %v595
    %v633 = vunpack.c.l.b16 %v596
    %v634 = vunpack.c.l.b16 %v597
    %v635 = vunpack.c.l.b16 %v598
    %v636 = vunpack.c.l.b16 %v599
    %v637 = vpack.c.b16 %v622, %v621
    %v638 = vpack.c.b16 %v624, %v623
    %v639 = vpack.c.b16 %v626, %v625
    %v640 = vpack.c.b16 %v628, %v627
    %v641 = vpack.c.b16 %v630, %v629
    %v642 = vpack.c.b16 %v632, %v631
    %v643 = vpack.c.b16 %v634, %v633
    %v644 = vpack.c.b16 %v636, %v635
    %653 = vmatprep.subr.bf16.mxu0 0
    %654 = vmatpush1.bf16.msra.mxu0 %v637
    %655 = vmatprep.subr.bf16.mxu0 0
    %656 = vmatpush1.bf16.msra.mxu0 %v638
    %657 = vmatprep.subr.bf16.mxu0 0
    %658 = vmatpush1.bf16.msra.mxu0 %v639
    %659 = vmatprep.subr.bf16.mxu0 0
    %660 = vmatpush1.bf16.msra.mxu0 %v640
    %661 = vmatprep.subr.bf16.mxu0 0
    %662 = vmatpush1.bf16.msra.mxu0 %v641
    %663 = vmatprep.subr.bf16.mxu0 0
    %664 = vmatpush1.bf16.msra.mxu0 %v642
    %665 = vmatprep.subr.bf16.mxu0 0
    %666 = vmatpush1.bf16.msra.mxu0 %v643
    %667 = vmatprep.subr.bf16.mxu0 0
    %668 = vmatpush1.bf16.msra.mxu0 %v644
    %669 = vmatprep.subr.bf16.mxu0 0
    %670 = vmatpush1.bf16.msra.mxu0 0
    %671 = vmatprep.subr.bf16.mxu0 0
    %672 = vmatpush1.bf16.msra.mxu0 0
    %673 = vmatprep.subr.bf16.mxu0 0
    %674 = vmatpush1.bf16.msra.mxu0 0
    %675 = vmatprep.subr.bf16.mxu0 0
    %676 = vmatpush1.bf16.msra.mxu0 0
    %677 = vmatprep.subr.bf16.mxu0 0
    %678 = vmatpush1.bf16.msra.mxu0 0
    %679 = vmatprep.subr.bf16.mxu0 0
    %680 = vmatpush1.bf16.msra.mxu0 0
    %681 = vmatprep.subr.bf16.mxu0 0
    %682 = vmatpush1.bf16.msra.mxu0 0
    %683 = vmatprep.subr.bf16.mxu0 0
    %684 = vmatpush1.bf16.msra.mxu0 0
    %685 = vmatprep.mubr.bf16.mxu0 0
    %686 = vmatmul.mubr.bf16.gmra.mrb[0].mxu0 %v583
    %v687 = vpop.f32.mrb[0].mxu0
    %v688 = vadd.f32 %v604, %v687
    %v689 = vpop.f32.mrb[0].mxu0
    %v690 = vpop.f32.mrb[0].mxu0
    %v691 = vadd.f32 %v604, %v690
    %v692 = vpop.f32.mrb[0].mxu0
    %693 = vdwg.mxu0
    %v694 = vmax.f32 %v688, 0.0
    %v695 = vmax.f32 %v691, 0.0
    %v696 = vpack.c.bf16 %v695, %v694
    %v697 = vld [vmem:[#allocation13] sm:$0xf]
    %v698 = vld [vmem:[#allocation13 + $0x4] sm:$0xf]
    %v699 = vld [vmem:[#allocation13 + $0x8] sm:$0xf]
    %v700 = vld [vmem:[#allocation13 + $0xc] sm:$0xf]
    %v701 = vld [vmem:[#allocation13 + $0x10] sm:$0xf]
    %v702 = vld [vmem:[#allocation13 + $0x14] sm:$0xf]
    %v703 = vld [vmem:[#allocation13 + $0x18] sm:$0xf]
    %v704 = vld [vmem:[#allocation13 + $0x1c] sm:$0xf]
    %v705 = vld [vmem:[#allocation13 + $0x20] sm:$0xf]
    %v706 = vld [vmem:[#allocation13 + $0x24] sm:$0xf]
    %v707 = vld [vmem:[#allocation13 + $0x28] sm:$0xf]
    %v708 = vld [vmem:[#allocation13 + $0x2c] sm:$0xf]
    %v709 = vld [vmem:[#allocation13 + $0x30] sm:$0xf]
    %v710 = vld [vmem:[#allocation13 + $0x34] sm:$0xf]
    %v711 = vld [vmem:[#allocation13 + $0x38] sm:$0xf]
    %v712 = vld [vmem:[#allocation13 + $0x3c] sm:$0xf]
    %v713 = vld [vmem:[%s7 + $0x5] sm:$0x1]
    %v714 = vlaneseq
    %v715 = vshrl.u32 %v714, 7
    %v716 = vsub.s32 0, %v715
    %v717 = vrot.slane %v713, %v716
    %v734 = vunpack.c.l.b16 %v697
    %v735 = vunpack.c.l.b16 %v698
    %v736 = vunpack.c.l.b16 %v699
    %v737 = vunpack.c.l.b16 %v700
    %v738 = vunpack.c.l.b16 %v701
    %v739 = vunpack.c.l.b16 %v702
    %v740 = vunpack.c.l.b16 %v703
    %v741 = vunpack.c.l.b16 %v704
    %v742 = vunpack.c.l.b16 %v705
    %v743 = vunpack.c.l.b16 %v706
    %v744 = vunpack.c.l.b16 %v707
    %v745 = vunpack.c.l.b16 %v708
    %v746 = vunpack.c.l.b16 %v709
    %v747 = vunpack.c.l.b16 %v710
    %v748 = vunpack.c.l.b16 %v711
    %v749 = vunpack.c.l.b16 %v712
    %v750 = vpack.c.b16 %v735, %v734
    %v751 = vpack.c.b16 %v737, %v736
    %v752 = vpack.c.b16 %v739, %v738
    %v753 = vpack.c.b16 %v741, %v740
    %v754 = vpack.c.b16 %v743, %v742
    %v755 = vpack.c.b16 %v745, %v744
    %v756 = vpack.c.b16 %v747, %v746
    %v757 = vpack.c.b16 %v749, %v748
    %766 = vmatprep.subr.bf16.mxu0 0
    %767 = vmatpush1.bf16.msra.mxu0 %v750
    %768 = vmatprep.subr.bf16.mxu0 0
    %769 = vmatpush1.bf16.msra.mxu0 %v751
    %770 = vmatprep.subr.bf16.mxu0 0
    %771 = vmatpush1.bf16.msra.mxu0 %v752
    %772 = vmatprep.subr.bf16.mxu0 0
    %773 = vmatpush1.bf16.msra.mxu0 %v753
    %774 = vmatprep.subr.bf16.mxu0 0
    %775 = vmatpush1.bf16.msra.mxu0 %v754
    %776 = vmatprep.subr.bf16.mxu0 0
    %777 = vmatpush1.bf16.msra.mxu0 %v755
    %778 = vmatprep.subr.bf16.mxu0 0
    %779 = vmatpush1.bf16.msra.mxu0 %v756
    %780 = vmatprep.subr.bf16.mxu0 0
    %781 = vmatpush1.bf16.msra.mxu0 %v757
    %782 = vmatprep.subr.bf16.mxu0 0
    %783 = vmatpush1.bf16.msra.mxu0 0
    %784 = vmatprep.subr.bf16.mxu0 0
    %785 = vmatpush1.bf16.msra.mxu0 0
    %786 = vmatprep.subr.bf16.mxu0 0
    %787 = vmatpush1.bf16.msra.mxu0 0
    %788 = vmatprep.subr.bf16.mxu0 0
    %789 = vmatpush1.bf16.msra.mxu0 0
    %790 = vmatprep.subr.bf16.mxu0 0
    %791 = vmatpush1.bf16.msra.mxu0 0
    %792 = vmatprep.subr.bf16.mxu0 0
    %793 = vmatpush1.bf16.msra.mxu0 0
    %794 = vmatprep.subr.bf16.mxu0 0
    %795 = vmatpush1.bf16.msra.mxu0 0
    %796 = vmatprep.subr.bf16.mxu0 0
    %797 = vmatpush1.bf16.msra.mxu0 0
    %798 = vmatprep.mubr.bf16.mxu0 0
    %799 = vmatmul.mubr.bf16.gmra.mrb[0].mxu0 %v696
    %v800 = vpop.f32.mrb[0].mxu0
    %v801 = vadd.f32 %v717, %v800
    %v802 = vpop.f32.mrb[0].mxu0
    %v803 = vpop.f32.mrb[0].mxu0
    %v804 = vadd.f32 %v717, %v803
    %v805 = vpop.f32.mrb[0].mxu0
    %806 = vdwg.mxu0
    %807 = vst [vmem:[#allocation14] sm:$0xff] %v801
    %808 = vst [vmem:[#allocation14 + $0x8] sm:$0xff] %v804
    // Predicated region
    $region62: #{tpu_custom_call.1} parent=1 // pred_check
      _
    $region63: #{tpu_custom_call.1} parent=1 // pred_check_branch
      %810 = sbr.rel (0) target = $region65
    $region64: #{tpu_custom_call.1} parent=1 // pred_region
      %s812 = ssub.s32 256, 256
      %813 = vsyncadd [#allocation4], %s812
      %s814 = sshll.u32 [#allocation14], 4
      %s815 = int_to_ptr.vmem [resolvable:$true] %s814
      %820 = dma.vmem_to_hbm [thread:$0]  %s815, 256, %s8, [#allocation4], 128, 128, 8
    $region65: #{tpu_custom_call.1} parent=1 // pred_fallthru
      _
    // Predicated region
    $region66: #{tpu_custom_call.1} parent=1 // pred_check
      _
    $region67: #{tpu_custom_call.1} parent=1 // pred_check_branch
      %822 = sbr.rel (0) target = $region69
    $region68: #{tpu_custom_call.1} parent=1 // pred_region
      %823 = dma.done [#allocation4], 256
    $region69: #{tpu_custom_call.1} parent=1 // pred_fallthru
      _
    %824 = vsyncpa [#allocation3], 1
    %825 = vsyncpa [#allocation6], 1
    %826 = vsyncpa [#allocation9], 1
    %827 = vsyncpa [#allocation12], 1
    %828 = vsyncpa [#allocation4], 1

</llo_original>
